<compile_context>
chip_gen: v7x
topology: tpu7x:2x2x1
jax: 0.10.0
libtpu: 0.0.40
codegen_flags: <defaults>
</compile_context>

<pallas_src>
import jax
import jax.numpy as jnp
from jax import lax
from jax.experimental import pallas as pl
from jax.experimental.pallas import tpu as pltpu


def _make_lstm_kernel(layer_dim, hidden_dim, chunk, batch_pad):
    """Kernel for `layer_dim` stacked LSTM layers + FC head, `chunk` steps/grid.

    Ref order (inputs..., outputs..., scratch...):
      x_ref,                          # (chunk*Bp, D_in)  flattened input chunk
      [wih_l, whh_l, b_l] * layers,   # (D_l, 4H), (H, 4H), (1, 4H)  [i,f,o,g]
      fcw_ref, fcb_ref,               # (H, Dout_pad), (1, Dout_pad)
      out_ref,                        # (chunk*Bp, Dout_pad)
      h_scr, c_scr,                   # (layers, Bp, H)  VMEM state carries
      hseq,                           # (chunk*Bp, H)    current layer outputs
      xg_scr                          # (chunk*Bp, 4H)   staged gate pre-acts
    """
    H = hidden_dim
    Bp = batch_pad
    unrolled = chunk <= 32  # short fixed trip count -> full unroll

    def kernel(*refs):
        x_ref = refs[0]
        n_p = 3 * layer_dim
        fcw_ref = refs[1 + n_p]
        fcb_ref = refs[2 + n_p]
        out_ref = refs[3 + n_p]
        h_scr = refs[4 + n_p]
        c_scr = refs[5 + n_p]
        hseq = refs[6 + n_p]
        xg_scr = refs[7 + n_p]

        c_idx = pl.program_id(0)

        @pl.when(c_idx == 0)
        def _init():
            h_scr[...] = jnp.zeros_like(h_scr)
            c_scr[...] = jnp.zeros_like(c_scr)

        for layer in range(layer_dim):
            wih_ref = refs[1 + 3 * layer]   # (D_l, 4H), gate order [i,f,o,g]
            whh_ref = refs[2 + 3 * layer]   # (H, 4H)
            b_ref = refs[3 + 3 * layer]     # (1, 4H) = b_ih + b_hh

            # Input sequence for this layer: raw chunk for layer 0, previous
            # layer's hidden sequence otherwise (read before hseq is rewritten).
            seq_in = x_ref[...] if layer == 0 else hseq[...]

            # Non-recurrent contribution for all chunk timesteps in ONE MXU
            # matmul, staged in VMEM scratch (not live across the recurrence).
            xg_scr[...] = (
                jnp.dot(seq_in, wih_ref[...],
                        preferred_element_type=jnp.float32)
                + b_ref[...])

            whh = whh_ref[...]

            def step(tt, carry, whh=whh):
                h_prev, c_prev = carry
                row = tt * Bp
                if not isinstance(tt, int):
                    row = pl.multiple_of(row, Bp)   # sublane-aligned start
                pre = xg_scr[pl.ds(row, Bp), :] + jnp.dot(
                    h_prev, whh, preferred_element_type=jnp.float32)
                # Gates repacked [i, f, o | g]: one wide sigmoid + one tanh.
                ifo = jax.nn.sigmoid(pre[:, :3 * H])
                g_g = jnp.tanh(pre[:, 3 * H:])
                c_new = ifo[:, H:2 * H] * c_prev + ifo[:, :H] * g_g
                h_new = ifo[:, 2 * H:3 * H] * jnp.tanh(c_new)
                hseq[pl.ds(row, Bp), :] = h_new   # sublane-aligned store
                return (h_new, c_new)

            carry = (h_scr[layer], c_scr[layer])
            if unrolled:
                for tt in range(chunk):
                    carry = step(tt, carry)
            else:
                carry = lax.fori_loop(0, chunk, step, carry)
            h_scr[layer] = carry[0]
            c_scr[layer] = carry[1]

        # FC head: one lane-dense matmul + one lane-dense store per chunk.
        out = jnp.dot(hseq[...], fcw_ref[...],
                      preferred_element_type=jnp.float32) + fcb_ref[...]
        out_ref[...] = out.astype(out_ref.dtype)

    return kernel


def lst_model_pallas(x, lstm_params, fc_w, fc_b, hidden_dim, layer_dim):
    """Forward pass of LSTModel (nn.LSTM(batch_first=True) + nn.Linear).

    x: (B, T, D_in) float32
    lstm_params: per layer (w_ih (4H, D_l), w_hh (4H, H), b_ih (4H,), b_hh (4H,))
        with PyTorch gate order [i, f, g, o] along the 4H axis.
    fc_w: (D_out, H), fc_b: (D_out,)   (PyTorch nn.Linear layout)
    returns (B, T, D_out)
    """
    B, T, D_in = x.shape
    H = hidden_dim
    out_dim = fc_w.shape[0]
    out_pad = ((out_dim + 127) // 128) * 128

    # Sublane-align the batch so per-timestep state slices/stores are dense.
    Bp = ((B + 7) // 8) * 8
    # Pick a chunk targeting ~512 rows per grid step; pad T instead of
    # requiring divisibility (chunk never degrades to per-step overhead hell).
    chunk = max(1, min(T, 512 // Bp))
    T_pad = ((T + chunk - 1) // chunk) * chunk

    # Zero-pad batch/time and flatten to time-major 2-D slabs: row (t, b).
    x_p = jnp.zeros((Bp, T_pad, D_in), x.dtype).at[:B, :T].set(x)
    x2d = jnp.transpose(x_p, (1, 0, 2)).reshape(T_pad * Bp, D_in)

    # Repack weights: transpose to (D_l, 4H)/(H, 4H), fuse biases, and reorder
    # gates [i,f,g,o] -> [i,f,o,g] so the kernel applies one wide sigmoid.
    perm = jnp.concatenate([
        jnp.arange(0, H), jnp.arange(H, 2 * H),
        jnp.arange(3 * H, 4 * H), jnp.arange(2 * H, 3 * H)])
    packed = []
    for (w_ih, w_hh, b_ih, b_hh) in lstm_params:
        packed.append((jnp.transpose(w_ih[perm, :]),
                       jnp.transpose(w_hh[perm, :]),
                       (b_ih + b_hh)[perm].reshape(1, 4 * H)))

    # FC head zero-padded to a full 128-lane width (lane-dense output store).
    fcw_p = jnp.zeros((H, out_pad), fc_w.dtype).at[:, :out_dim].set(
        jnp.transpose(fc_w))
    fcb_p = jnp.zeros((1, out_pad), fc_b.dtype).at[:, :out_dim].set(
        fc_b.reshape(1, out_dim))

    kernel = _make_lstm_kernel(layer_dim, H, chunk, Bp)

    flat_params = [x2d]
    in_specs = [pl.BlockSpec((chunk * Bp, D_in), lambda c: (c, 0))]
    for wih, whh, b in packed:
        for w in (wih, whh, b):
            flat_params.append(w)
            # TODO(synk): single-buffer or stream these constant weight blocks
            # (pl.ANY + make_async_copy, bf16) at production H.
            in_specs.append(pl.BlockSpec(tuple(w.shape), lambda c: (0, 0)))
    flat_params += [fcw_p, fcb_p]
    in_specs.append(pl.BlockSpec((H, out_pad), lambda c: (0, 0)))
    in_specs.append(pl.BlockSpec((1, out_pad), lambda c: (0, 0)))

    # VMEM footprint estimate; raise the scoped limit only once it matters.
    def _sz(shape):
        n = 4
        for s in shape:
            n *= int(s)
        return n

    vmem_need = 2 * _sz((chunk * Bp, D_in)) + 2 * _sz((chunk * Bp, out_pad))
    for wih, whh, b in packed:
        vmem_need += 2 * (_sz(wih.shape) + _sz(whh.shape) + _sz(b.shape))
    vmem_need += 2 * (_sz((H, out_pad)) + _sz((1, out_pad)))
    vmem_need += (2 * _sz((layer_dim, Bp, H)) + _sz((chunk * Bp, H))
                  + _sz((chunk * Bp, 4 * H)))
    vmem_limit = None
    if vmem_need > (16 << 20):
        vmem_limit = int(min(vmem_need + (8 << 20), 96 << 20))

    out2d = pl.pallas_call(
        kernel,
        out_shape=jax.ShapeDtypeStruct((T_pad * Bp, out_pad), x.dtype),
        grid_spec=pltpu.PrefetchScalarGridSpec(
            num_scalar_prefetch=0,
            grid=(T_pad // chunk,),
            in_specs=in_specs,
            out_specs=pl.BlockSpec((chunk * Bp, out_pad), lambda c: (c, 0)),
            scratch_shapes=[
                pltpu.VMEM((layer_dim, Bp, H), jnp.float32),    # h state
                pltpu.VMEM((layer_dim, Bp, H), jnp.float32),    # c state
                pltpu.VMEM((chunk * Bp, H), jnp.float32),       # h sequence
                pltpu.VMEM((chunk * Bp, 4 * H), jnp.float32),   # staged xg
            ],
        ),
        # The time-chunk axis carries state in scratch -> sequential.
        compiler_params=pltpu.CompilerParams(
            dimension_semantics=("arbitrary",),
            vmem_limit_bytes=vmem_limit),
    )(*flat_params)

    out = out2d.reshape(T_pad, Bp, out_pad)[:T, :B, :out_dim]
    return jnp.transpose(out, (1, 0, 2))  # back to (B, T, D_out)


def reference(x, lstm_params, fc_w, fc_b, hidden_dim, layer_dim):
    """Pure-JAX reference matching torch.nn.LSTM(batch_first=True) + Linear."""
    B, T, _ = x.shape
    H = hidden_dim
    seq = x
    for (w_ih, w_hh, b_ih, b_hh) in lstm_params:

        def step(carry, x_t, w_ih=w_ih, w_hh=w_hh, b_ih=b_ih, b_hh=b_hh):
            h, c = carry
            pre = x_t @ w_ih.T + h @ w_hh.T + b_ih + b_hh
            i = jax.nn.sigmoid(pre[:, 0 * H:1 * H])
            f = jax.nn.sigmoid(pre[:, 1 * H:2 * H])
            g = jnp.tanh(pre[:, 2 * H:3 * H])
            o = jax.nn.sigmoid(pre[:, 3 * H:4 * H])
            c_new = f * c + i * g
            h_new = o * jnp.tanh(c_new)
            return (h_new, c_new), h_new

        h0 = jnp.zeros((B, H), jnp.float32)
        c0 = jnp.zeros((B, H), jnp.float32)
        _, hs = lax.scan(step, (h0, c0), jnp.transpose(seq, (1, 0, 2)))
        seq = jnp.transpose(hs, (1, 0, 2))
    return seq @ fc_w.T + fc_b


if __name__ == "__main__":
    # Small shapes consistent with the module's forward pass.
    B, T = 2, 8
    input_dim, hidden_dim, layer_dim, output_dim = 16, 32, 2, 8

    key = jax.random.PRNGKey(0)
    k_lstm = 1.0 / float(jnp.sqrt(hidden_dim))

    # Deterministic init mirroring nn.LSTM's U(-1/sqrt(H), 1/sqrt(H)), PyTorch
    # weight layout and gate order [i, f, g, o]; the wrapper does the repacking.
    lstm_params = []
    for layer in range(layer_dim):
        in_l = input_dim if layer == 0 else hidden_dim
        key, k1, k2, k3, k4 = jax.random.split(key, 5)
        w_ih = jax.random.uniform(k1, (4 * hidden_dim, in_l), jnp.float32,
                                  -k_lstm, k_lstm)
        w_hh = jax.random.uniform(k2, (4 * hidden_dim, hidden_dim), jnp.float32,
                                  -k_lstm, k_lstm)
        b_ih = jax.random.uniform(k3, (4 * hidden_dim,), jnp.float32,
                                  -k_lstm, k_lstm)
        b_hh = jax.random.uniform(k4, (4 * hidden_dim,), jnp.float32,
                                  -k_lstm, k_lstm)
        lstm_params.append((w_ih, w_hh, b_ih, b_hh))

    key, k5, k6, kx = jax.random.split(key, 4)
    k_fc = 1.0 / float(jnp.sqrt(hidden_dim))
    fc_w = jax.random.uniform(k5, (output_dim, hidden_dim), jnp.float32,
                              -k_fc, k_fc)
    fc_b = jax.random.uniform(k6, (output_dim,), jnp.float32, -k_fc, k_fc)

    x = jax.random.normal(kx, (B, T, input_dim), jnp.float32)

    out = lst_model_pallas(x, lstm_params, fc_w, fc_b, hidden_dim, layer_dim)
    out = jax.block_until_ready(out)

    ref = reference(x, lstm_params, fc_w, fc_b, hidden_dim, layer_dim)
    assert out.shape == (B, T, output_dim), out.shape
    max_err = float(jnp.max(jnp.abs(out - ref)))
    assert jnp.allclose(out, ref, atol=2e-5, rtol=2e-5), max_err

    print("KERNEL_OK")
</pallas_src>

<mosaic_0001>
module attributes {stable_mosaic.version = 11 : i64} {
  func.func @kernel(%arg0: i32, %arg1: memref<64x16xf32, #tpu.memory_space<vmem>>, %arg2: memref<16x128xf32, #tpu.memory_space<vmem>>, %arg3: memref<32x128xf32, #tpu.memory_space<vmem>>, %arg4: memref<1x128xf32, #tpu.memory_space<vmem>>, %arg5: memref<32x128xf32, #tpu.memory_space<vmem>>, %arg6: memref<32x128xf32, #tpu.memory_space<vmem>>, %arg7: memref<1x128xf32, #tpu.memory_space<vmem>>, %arg8: memref<32x128xf32, #tpu.memory_space<vmem>>, %arg9: memref<1x128xf32, #tpu.memory_space<vmem>>, %arg10: memref<64x128xf32, #tpu.memory_space<vmem>>, %arg11: memref<2x8x32xf32, #tpu.memory_space<vmem>>, %arg12: memref<2x8x32xf32, #tpu.memory_space<vmem>>, %arg13: memref<64x32xf32, #tpu.memory_space<vmem>>, %arg14: memref<64x128xf32, #tpu.memory_space<vmem>>) attributes {dimension_semantics = [#tpu.dimension_semantics<arbitrary>], iteration_bounds = array<i64: 1>, scalar_prefetch = 0 : i64, scratch_operands = 4 : i64, tpu.core_type = #tpu.core_type<tc>, window_params = [{transform_indices = @transform_0, window_bounds = array<i64: 64, 16>}, {pipeline_mode = #tpu.pipeline_mode<synchronous>, transform_indices = @transform_1, window_bounds = array<i64: 16, 128>}, {pipeline_mode = #tpu.pipeline_mode<synchronous>, transform_indices = @transform_2, window_bounds = array<i64: 32, 128>}, {pipeline_mode = #tpu.pipeline_mode<synchronous>, transform_indices = @transform_3, window_bounds = array<i64: 1, 128>}, {pipeline_mode = #tpu.pipeline_mode<synchronous>, transform_indices = @transform_4, window_bounds = array<i64: 32, 128>}, {pipeline_mode = #tpu.pipeline_mode<synchronous>, transform_indices = @transform_5, window_bounds = array<i64: 32, 128>}, {pipeline_mode = #tpu.pipeline_mode<synchronous>, transform_indices = @transform_6, window_bounds = array<i64: 1, 128>}, {pipeline_mode = #tpu.pipeline_mode<synchronous>, transform_indices = @transform_7, window_bounds = array<i64: 32, 128>}, {pipeline_mode = #tpu.pipeline_mode<synchronous>, transform_indices = @transform_8, window_bounds = array<i64: 1, 128>}, {transform_indices = @transform_9, window_bounds = array<i64: 64, 128>}]} {
    %c0_i32 = arith.constant 0 : i32
    %0 = arith.cmpi eq, %arg0, %c0_i32 : i32
    %1 = arith.extui %0 : i1 to i32
    %c0_i32_0 = arith.constant 0 : i32
    %2 = arith.cmpi ne, %1, %c0_i32_0 : i32
    scf.if %2 {
      %cst_142 = arith.constant 0.000000e+00 : f32
      %366 = vector.broadcast %cst_142 : f32 to vector<2x8x32xf32>
      %c0_143 = arith.constant 0 : index
      %c0_144 = arith.constant 0 : index
      %c0_145 = arith.constant 0 : index
      %367 = vector.load %arg11[%c0_143, %c0_144, %c0_145] : memref<2x8x32xf32, #tpu.memory_space<vmem>>, vector<2x8x32xf32>
      tpu.vector_store %arg11[%c0_143, %c0_144, %c0_145], %366 {strides = array<i32>} : memref<2x8x32xf32, #tpu.memory_space<vmem>>, vector<2x8x32xf32>,
      %cst_146 = arith.constant 0.000000e+00 : f32
      %368 = vector.broadcast %cst_146 : f32 to vector<2x8x32xf32>
      %c0_147 = arith.constant 0 : index
      %c0_148 = arith.constant 0 : index
      %c0_149 = arith.constant 0 : index
      %369 = vector.load %arg12[%c0_147, %c0_148, %c0_149] : memref<2x8x32xf32, #tpu.memory_space<vmem>>, vector<2x8x32xf32>
      tpu.vector_store %arg12[%c0_147, %c0_148, %c0_149], %368 {strides = array<i32>} : memref<2x8x32xf32, #tpu.memory_space<vmem>>, vector<2x8x32xf32>,
    } else {
    }
    %c0 = arith.constant 0 : index
    %c0_1 = arith.constant 0 : index
    %3 = vector.load %arg1[%c0, %c0_1] : memref<64x16xf32, #tpu.memory_space<vmem>>, vector<64x16xf32>
    %c0_2 = arith.constant 0 : index
    %c0_3 = arith.constant 0 : index
    %4 = vector.load %arg2[%c0_2, %c0_3] : memref<16x128xf32, #tpu.memory_space<vmem>>, vector<16x128xf32>
    %cst = arith.constant dense<0.000000e+00> : vector<64x128xf32>
    %5 = tpu.matmul %3, %4, %cst {dimension_numbers = #tpu.dot_dimension_numbers<[1], [0], [0], [1], [0, 0, 1, 1], [], []>} : vector<64x16xf32>, vector<16x128xf32>, vector<64x128xf32> -> vector<64x128xf32>
    %c0_4 = arith.constant 0 : index
    %c0_5 = arith.constant 0 : index
    %6 = vector.load %arg4[%c0_4, %c0_5] : memref<1x128xf32, #tpu.memory_space<vmem>>, vector<1x128xf32>
    %7 = vector.broadcast %6 : vector<1x128xf32> to vector<64x128xf32>
    %8 = arith.addf %5, %7 : vector<64x128xf32>
    %c0_6 = arith.constant 0 : index
    %c0_7 = arith.constant 0 : index
    %9 = vector.load %arg14[%c0_6, %c0_7] : memref<64x128xf32, #tpu.memory_space<vmem>>, vector<64x128xf32>
    tpu.vector_store %arg14[%c0_6, %c0_7], %8 {strides = array<i32>} : memref<64x128xf32, #tpu.memory_space<vmem>>, vector<64x128xf32>,
    %c0_8 = arith.constant 0 : index
    %c0_9 = arith.constant 0 : index
    %10 = vector.load %arg3[%c0_8, %c0_9] : memref<32x128xf32, #tpu.memory_space<vmem>>, vector<32x128xf32>
    %c0_10 = arith.constant 0 : index
    %c0_11 = arith.constant 0 : index
    %c0_12 = arith.constant 0 : index
    %11 = vector.load %arg11[%c0_10, %c0_11, %c0_12] : memref<2x8x32xf32, #tpu.memory_space<vmem>>, vector<1x8x32xf32>
    %12 = vector.shape_cast %11 : vector<1x8x32xf32> to vector<8x32xf32>
    %c0_13 = arith.constant 0 : index
    %c0_14 = arith.constant 0 : index
    %c0_15 = arith.constant 0 : index
    %13 = vector.load %arg12[%c0_13, %c0_14, %c0_15] : memref<2x8x32xf32, #tpu.memory_space<vmem>>, vector<1x8x32xf32>
    %14 = vector.shape_cast %13 : vector<1x8x32xf32> to vector<8x32xf32>
    %c0_16 = arith.constant 0 : index
    %c0_17 = arith.constant 0 : index
    %15 = vector.load %arg14[%c0_16, %c0_17] : memref<64x128xf32, #tpu.memory_space<vmem>>, vector<8x128xf32>
    %cst_18 = arith.constant dense<0.000000e+00> : vector<8x128xf32>
    %16 = tpu.matmul %12, %10, %cst_18 {dimension_numbers = #tpu.dot_dimension_numbers<[1], [0], [0], [1], [0, 0, 1, 1], [], []>} : vector<8x32xf32>, vector<32x128xf32>, vector<8x128xf32> -> vector<8x128xf32>
    %17 = arith.addf %15, %16 : vector<8x128xf32>
    %18 = vector.extract_strided_slice %17 {offsets = [0, 0], sizes = [8, 96], strides = [1, 1]} : vector<8x128xf32> to vector<8x96xf32>
    %19 = arith.negf %18 : vector<8x96xf32>
    %20 = math.exp %19 : vector<8x96xf32>
    %cst_19 = arith.constant 1.000000e+00 : f32
    %21 = vector.broadcast %cst_19 : f32 to vector<8x96xf32>
    %22 = arith.addf %21, %20 : vector<8x96xf32>
    %23 = arith.divf %21, %22 : vector<8x96xf32>
    %24 = vector.extract_strided_slice %17 {offsets = [0, 96], sizes = [8, 32], strides = [1, 1]} : vector<8x128xf32> to vector<8x32xf32>
    %25 = math.tanh %24 : vector<8x32xf32>
    %26 = vector.extract_strided_slice %23 {offsets = [0, 32], sizes = [8, 32], strides = [1, 1]} : vector<8x96xf32> to vector<8x32xf32>
    %27 = arith.mulf %26, %14 : vector<8x32xf32>
    %28 = vector.extract_strided_slice %23 {offsets = [0, 0], sizes = [8, 32], strides = [1, 1]} : vector<8x96xf32> to vector<8x32xf32>
    %29 = arith.mulf %28, %25 : vector<8x32xf32>
    %30 = arith.addf %27, %29 : vector<8x32xf32>
    %31 = vector.extract_strided_slice %23 {offsets = [0, 64], sizes = [8, 32], strides = [1, 1]} : vector<8x96xf32> to vector<8x32xf32>
    %32 = math.tanh %30 : vector<8x32xf32>
    %33 = arith.mulf %31, %32 : vector<8x32xf32>
    %c0_20 = arith.constant 0 : index
    %c0_21 = arith.constant 0 : index
    %34 = vector.load %arg13[%c0_20, %c0_21] : memref<64x32xf32, #tpu.memory_space<vmem>>, vector<8x32xf32>
    tpu.vector_store %arg13[%c0_20, %c0_21], %33 {strides = array<i32>} : memref<64x32xf32, #tpu.memory_space<vmem>>, vector<8x32xf32>,
    %c8 = arith.constant 8 : index
    %c0_22 = arith.constant 0 : index
    %35 = vector.load %arg14[%c8, %c0_22] : memref<64x128xf32, #tpu.memory_space<vmem>>, vector<8x128xf32>
    %cst_23 = arith.constant dense<0.000000e+00> : vector<8x128xf32>
    %36 = tpu.matmul %33, %10, %cst_23 {dimension_numbers = #tpu.dot_dimension_numbers<[1], [0], [0], [1], [0, 0, 1, 1], [], []>} : vector<8x32xf32>, vector<32x128xf32>, vector<8x128xf32> -> vector<8x128xf32>
    %37 = arith.addf %35, %36 : vector<8x128xf32>
    %38 = vector.extract_strided_slice %37 {offsets = [0, 0], sizes = [8, 96], strides = [1, 1]} : vector<8x128xf32> to vector<8x96xf32>
    %39 = arith.negf %38 : vector<8x96xf32>
    %40 = math.exp %39 : vector<8x96xf32>
    %cst_24 = arith.constant 1.000000e+00 : f32
    %41 = vector.broadcast %cst_24 : f32 to vector<8x96xf32>
    %42 = arith.addf %41, %40 : vector<8x96xf32>
    %43 = arith.divf %41, %42 : vector<8x96xf32>
    %44 = vector.extract_strided_slice %37 {offsets = [0, 96], sizes = [8, 32], strides = [1, 1]} : vector<8x128xf32> to vector<8x32xf32>
    %45 = math.tanh %44 : vector<8x32xf32>
    %46 = vector.extract_strided_slice %43 {offsets = [0, 32], sizes = [8, 32], strides = [1, 1]} : vector<8x96xf32> to vector<8x32xf32>
    %47 = arith.mulf %46, %30 : vector<8x32xf32>
    %48 = vector.extract_strided_slice %43 {offsets = [0, 0], sizes = [8, 32], strides = [1, 1]} : vector<8x96xf32> to vector<8x32xf32>
    %49 = arith.mulf %48, %45 : vector<8x32xf32>
    %50 = arith.addf %47, %49 : vector<8x32xf32>
    %51 = vector.extract_strided_slice %43 {offsets = [0, 64], sizes = [8, 32], strides = [1, 1]} : vector<8x96xf32> to vector<8x32xf32>
    %52 = math.tanh %50 : vector<8x32xf32>
    %53 = arith.mulf %51, %52 : vector<8x32xf32>
    %c8_25 = arith.constant 8 : index
    %c0_26 = arith.constant 0 : index
    %54 = vector.load %arg13[%c8_25, %c0_26] : memref<64x32xf32, #tpu.memory_space<vmem>>, vector<8x32xf32>
    tpu.vector_store %arg13[%c8_25, %c0_26], %53 {strides = array<i32>} : memref<64x32xf32, #tpu.memory_space<vmem>>, vector<8x32xf32>,
    %c16 = arith.constant 16 : index
    %c0_27 = arith.constant 0 : index
    %55 = vector.load %arg14[%c16, %c0_27] : memref<64x128xf32, #tpu.memory_space<vmem>>, vector<8x128xf32>
    %cst_28 = arith.constant dense<0.000000e+00> : vector<8x128xf32>
    %56 = tpu.matmul %53, %10, %cst_28 {dimension_numbers = #tpu.dot_dimension_numbers<[1], [0], [0], [1], [0, 0, 1, 1], [], []>} : vector<8x32xf32>, vector<32x128xf32>, vector<8x128xf32> -> vector<8x128xf32>
    %57 = arith.addf %55, %56 : vector<8x128xf32>
    %58 = vector.extract_strided_slice %57 {offsets = [0, 0], sizes = [8, 96], strides = [1, 1]} : vector<8x128xf32> to vector<8x96xf32>
    %59 = arith.negf %58 : vector<8x96xf32>
    %60 = math.exp %59 : vector<8x96xf32>
    %cst_29 = arith.constant 1.000000e+00 : f32
    %61 = vector.broadcast %cst_29 : f32 to vector<8x96xf32>
    %62 = arith.addf %61, %60 : vector<8x96xf32>
    %63 = arith.divf %61, %62 : vector<8x96xf32>
    %64 = vector.extract_strided_slice %57 {offsets = [0, 96], sizes = [8, 32], strides = [1, 1]} : vector<8x128xf32> to vector<8x32xf32>
    %65 = math.tanh %64 : vector<8x32xf32>
    %66 = vector.extract_strided_slice %63 {offsets = [0, 32], sizes = [8, 32], strides = [1, 1]} : vector<8x96xf32> to vector<8x32xf32>
    %67 = arith.mulf %66, %50 : vector<8x32xf32>
    %68 = vector.extract_strided_slice %63 {offsets = [0, 0], sizes = [8, 32], strides = [1, 1]} : vector<8x96xf32> to vector<8x32xf32>
    %69 = arith.mulf %68, %65 : vector<8x32xf32>
    %70 = arith.addf %67, %69 : vector<8x32xf32>
    %71 = vector.extract_strided_slice %63 {offsets = [0, 64], sizes = [8, 32], strides = [1, 1]} : vector<8x96xf32> to vector<8x32xf32>
    %72 = math.tanh %70 : vector<8x32xf32>
    %73 = arith.mulf %71, %72 : vector<8x32xf32>
    %c16_30 = arith.constant 16 : index
    %c0_31 = arith.constant 0 : index
    %74 = vector.load %arg13[%c16_30, %c0_31] : memref<64x32xf32, #tpu.memory_space<vmem>>, vector<8x32xf32>
    tpu.vector_store %arg13[%c16_30, %c0_31], %73 {strides = array<i32>} : memref<64x32xf32, #tpu.memory_space<vmem>>, vector<8x32xf32>,
    %c24 = arith.constant 24 : index
    %c0_32 = arith.constant 0 : index
    %75 = vector.load %arg14[%c24, %c0_32] : memref<64x128xf32, #tpu.memory_space<vmem>>, vector<8x128xf32>
    %cst_33 = arith.constant dense<0.000000e+00> : vector<8x128xf32>
    %76 = tpu.matmul %73, %10, %cst_33 {dimension_numbers = #tpu.dot_dimension_numbers<[1], [0], [0], [1], [0, 0, 1, 1], [], []>} : vector<8x32xf32>, vector<32x128xf32>, vector<8x128xf32> -> vector<8x128xf32>
    %77 = arith.addf %75, %76 : vector<8x128xf32>
    %78 = vector.extract_strided_slice %77 {offsets = [0, 0], sizes = [8, 96], strides = [1, 1]} : vector<8x128xf32> to vector<8x96xf32>
    %79 = arith.negf %78 : vector<8x96xf32>
    %80 = math.exp %79 : vector<8x96xf32>
    %cst_34 = arith.constant 1.000000e+00 : f32
    %81 = vector.broadcast %cst_34 : f32 to vector<8x96xf32>
    %82 = arith.addf %81, %80 : vector<8x96xf32>
    %83 = arith.divf %81, %82 : vector<8x96xf32>
    %84 = vector.extract_strided_slice %77 {offsets = [0, 96], sizes = [8, 32], strides = [1, 1]} : vector<8x128xf32> to vector<8x32xf32>
    %85 = math.tanh %84 : vector<8x32xf32>
    %86 = vector.extract_strided_slice %83 {offsets = [0, 32], sizes = [8, 32], strides = [1, 1]} : vector<8x96xf32> to vector<8x32xf32>
    %87 = arith.mulf %86, %70 : vector<8x32xf32>
    %88 = vector.extract_strided_slice %83 {offsets = [0, 0], sizes = [8, 32], strides = [1, 1]} : vector<8x96xf32> to vector<8x32xf32>
    %89 = arith.mulf %88, %85 : vector<8x32xf32>
    %90 = arith.addf %87, %89 : vector<8x32xf32>
    %91 = vector.extract_strided_slice %83 {offsets = [0, 64], sizes = [8, 32], strides = [1, 1]} : vector<8x96xf32> to vector<8x32xf32>
    %92 = math.tanh %90 : vector<8x32xf32>
    %93 = arith.mulf %91, %92 : vector<8x32xf32>
    %c24_35 = arith.constant 24 : index
    %c0_36 = arith.constant 0 : index
    %94 = vector.load %arg13[%c24_35, %c0_36] : memref<64x32xf32, #tpu.memory_space<vmem>>, vector<8x32xf32>
    tpu.vector_store %arg13[%c24_35, %c0_36], %93 {strides = array<i32>} : memref<64x32xf32, #tpu.memory_space<vmem>>, vector<8x32xf32>,
    %c32 = arith.constant 32 : index
    %c0_37 = arith.constant 0 : index
    %95 = vector.load %arg14[%c32, %c0_37] : memref<64x128xf32, #tpu.memory_space<vmem>>, vector<8x128xf32>
    %cst_38 = arith.constant dense<0.000000e+00> : vector<8x128xf32>
    %96 = tpu.matmul %93, %10, %cst_38 {dimension_numbers = #tpu.dot_dimension_numbers<[1], [0], [0], [1], [0, 0, 1, 1], [], []>} : vector<8x32xf32>, vector<32x128xf32>, vector<8x128xf32> -> vector<8x128xf32>
    %97 = arith.addf %95, %96 : vector<8x128xf32>
    %98 = vector.extract_strided_slice %97 {offsets = [0, 0], sizes = [8, 96], strides = [1, 1]} : vector<8x128xf32> to vector<8x96xf32>
    %99 = arith.negf %98 : vector<8x96xf32>
    %100 = math.exp %99 : vector<8x96xf32>
    %cst_39 = arith.constant 1.000000e+00 : f32
    %101 = vector.broadcast %cst_39 : f32 to vector<8x96xf32>
    %102 = arith.addf %101, %100 : vector<8x96xf32>
    %103 = arith.divf %101, %102 : vector<8x96xf32>
    %104 = vector.extract_strided_slice %97 {offsets = [0, 96], sizes = [8, 32], strides = [1, 1]} : vector<8x128xf32> to vector<8x32xf32>
    %105 = math.tanh %104 : vector<8x32xf32>
    %106 = vector.extract_strided_slice %103 {offsets = [0, 32], sizes = [8, 32], strides = [1, 1]} : vector<8x96xf32> to vector<8x32xf32>
    %107 = arith.mulf %106, %90 : vector<8x32xf32>
    %108 = vector.extract_strided_slice %103 {offsets = [0, 0], sizes = [8, 32], strides = [1, 1]} : vector<8x96xf32> to vector<8x32xf32>
    %109 = arith.mulf %108, %105 : vector<8x32xf32>
    %110 = arith.addf %107, %109 : vector<8x32xf32>
    %111 = vector.extract_strided_slice %103 {offsets = [0, 64], sizes = [8, 32], strides = [1, 1]} : vector<8x96xf32> to vector<8x32xf32>
    %112 = math.tanh %110 : vector<8x32xf32>
    %113 = arith.mulf %111, %112 : vector<8x32xf32>
    %c32_40 = arith.constant 32 : index
    %c0_41 = arith.constant 0 : index
    %114 = vector.load %arg13[%c32_40, %c0_41] : memref<64x32xf32, #tpu.memory_space<vmem>>, vector<8x32xf32>
    tpu.vector_store %arg13[%c32_40, %c0_41], %113 {strides = array<i32>} : memref<64x32xf32, #tpu.memory_space<vmem>>, vector<8x32xf32>,
    %c40 = arith.constant 40 : index
    %c0_42 = arith.constant 0 : index
    %115 = vector.load %arg14[%c40, %c0_42] : memref<64x128xf32, #tpu.memory_space<vmem>>, vector<8x128xf32>
    %cst_43 = arith.constant dense<0.000000e+00> : vector<8x128xf32>
    %116 = tpu.matmul %113, %10, %cst_43 {dimension_numbers = #tpu.dot_dimension_numbers<[1], [0], [0], [1], [0, 0, 1, 1], [], []>} : vector<8x32xf32>, vector<32x128xf32>, vector<8x128xf32> -> vector<8x128xf32>
    %117 = arith.addf %115, %116 : vector<8x128xf32>
    %118 = vector.extract_strided_slice %117 {offsets = [0, 0], sizes = [8, 96], strides = [1, 1]} : vector<8x128xf32> to vector<8x96xf32>
    %119 = arith.negf %118 : vector<8x96xf32>
    %120 = math.exp %119 : vector<8x96xf32>
    %cst_44 = arith.constant 1.000000e+00 : f32
    %121 = vector.broadcast %cst_44 : f32 to vector<8x96xf32>
    %122 = arith.addf %121, %120 : vector<8x96xf32>
    %123 = arith.divf %121, %122 : vector<8x96xf32>
    %124 = vector.extract_strided_slice %117 {offsets = [0, 96], sizes = [8, 32], strides = [1, 1]} : vector<8x128xf32> to vector<8x32xf32>
    %125 = math.tanh %124 : vector<8x32xf32>
    %126 = vector.extract_strided_slice %123 {offsets = [0, 32], sizes = [8, 32], strides = [1, 1]} : vector<8x96xf32> to vector<8x32xf32>
    %127 = arith.mulf %126, %110 : vector<8x32xf32>
    %128 = vector.extract_strided_slice %123 {offsets = [0, 0], sizes = [8, 32], strides = [1, 1]} : vector<8x96xf32> to vector<8x32xf32>
    %129 = arith.mulf %128, %125 : vector<8x32xf32>
    %130 = arith.addf %127, %129 : vector<8x32xf32>
    %131 = vector.extract_strided_slice %123 {offsets = [0, 64], sizes = [8, 32], strides = [1, 1]} : vector<8x96xf32> to vector<8x32xf32>
    %132 = math.tanh %130 : vector<8x32xf32>
    %133 = arith.mulf %131, %132 : vector<8x32xf32>
    %c40_45 = arith.constant 40 : index
    %c0_46 = arith.constant 0 : index
    %134 = vector.load %arg13[%c40_45, %c0_46] : memref<64x32xf32, #tpu.memory_space<vmem>>, vector<8x32xf32>
    tpu.vector_store %arg13[%c40_45, %c0_46], %133 {strides = array<i32>} : memref<64x32xf32, #tpu.memory_space<vmem>>, vector<8x32xf32>,
    %c48 = arith.constant 48 : index
    %c0_47 = arith.constant 0 : index
    %135 = vector.load %arg14[%c48, %c0_47] : memref<64x128xf32, #tpu.memory_space<vmem>>, vector<8x128xf32>
    %cst_48 = arith.constant dense<0.000000e+00> : vector<8x128xf32>
    %136 = tpu.matmul %133, %10, %cst_48 {dimension_numbers = #tpu.dot_dimension_numbers<[1], [0], [0], [1], [0, 0, 1, 1], [], []>} : vector<8x32xf32>, vector<32x128xf32>, vector<8x128xf32> -> vector<8x128xf32>
    %137 = arith.addf %135, %136 : vector<8x128xf32>
    %138 = vector.extract_strided_slice %137 {offsets = [0, 0], sizes = [8, 96], strides = [1, 1]} : vector<8x128xf32> to vector<8x96xf32>
    %139 = arith.negf %138 : vector<8x96xf32>
    %140 = math.exp %139 : vector<8x96xf32>
    %cst_49 = arith.constant 1.000000e+00 : f32
    %141 = vector.broadcast %cst_49 : f32 to vector<8x96xf32>
    %142 = arith.addf %141, %140 : vector<8x96xf32>
    %143 = arith.divf %141, %142 : vector<8x96xf32>
    %144 = vector.extract_strided_slice %137 {offsets = [0, 96], sizes = [8, 32], strides = [1, 1]} : vector<8x128xf32> to vector<8x32xf32>
    %145 = math.tanh %144 : vector<8x32xf32>
    %146 = vector.extract_strided_slice %143 {offsets = [0, 32], sizes = [8, 32], strides = [1, 1]} : vector<8x96xf32> to vector<8x32xf32>
    %147 = arith.mulf %146, %130 : vector<8x32xf32>
    %148 = vector.extract_strided_slice %143 {offsets = [0, 0], sizes = [8, 32], strides = [1, 1]} : vector<8x96xf32> to vector<8x32xf32>
    %149 = arith.mulf %148, %145 : vector<8x32xf32>
    %150 = arith.addf %147, %149 : vector<8x32xf32>
    %151 = vector.extract_strided_slice %143 {offsets = [0, 64], sizes = [8, 32], strides = [1, 1]} : vector<8x96xf32> to vector<8x32xf32>
    %152 = math.tanh %150 : vector<8x32xf32>
    %153 = arith.mulf %151, %152 : vector<8x32xf32>
    %c48_50 = arith.constant 48 : index
    %c0_51 = arith.constant 0 : index
    %154 = vector.load %arg13[%c48_50, %c0_51] : memref<64x32xf32, #tpu.memory_space<vmem>>, vector<8x32xf32>
    tpu.vector_store %arg13[%c48_50, %c0_51], %153 {strides = array<i32>} : memref<64x32xf32, #tpu.memory_space<vmem>>, vector<8x32xf32>,
    %c56 = arith.constant 56 : index
    %c0_52 = arith.constant 0 : index
    %155 = vector.load %arg14[%c56, %c0_52] : memref<64x128xf32, #tpu.memory_space<vmem>>, vector<8x128xf32>
    %cst_53 = arith.constant dense<0.000000e+00> : vector<8x128xf32>
    %156 = tpu.matmul %153, %10, %cst_53 {dimension_numbers = #tpu.dot_dimension_numbers<[1], [0], [0], [1], [0, 0, 1, 1], [], []>} : vector<8x32xf32>, vector<32x128xf32>, vector<8x128xf32> -> vector<8x128xf32>
    %157 = arith.addf %155, %156 : vector<8x128xf32>
    %158 = vector.extract_strided_slice %157 {offsets = [0, 0], sizes = [8, 96], strides = [1, 1]} : vector<8x128xf32> to vector<8x96xf32>
    %159 = arith.negf %158 : vector<8x96xf32>
    %160 = math.exp %159 : vector<8x96xf32>
    %cst_54 = arith.constant 1.000000e+00 : f32
    %161 = vector.broadcast %cst_54 : f32 to vector<8x96xf32>
    %162 = arith.addf %161, %160 : vector<8x96xf32>
    %163 = arith.divf %161, %162 : vector<8x96xf32>
    %164 = vector.extract_strided_slice %157 {offsets = [0, 96], sizes = [8, 32], strides = [1, 1]} : vector<8x128xf32> to vector<8x32xf32>
    %165 = math.tanh %164 : vector<8x32xf32>
    %166 = vector.extract_strided_slice %163 {offsets = [0, 32], sizes = [8, 32], strides = [1, 1]} : vector<8x96xf32> to vector<8x32xf32>
    %167 = arith.mulf %166, %150 : vector<8x32xf32>
    %168 = vector.extract_strided_slice %163 {offsets = [0, 0], sizes = [8, 32], strides = [1, 1]} : vector<8x96xf32> to vector<8x32xf32>
    %169 = arith.mulf %168, %165 : vector<8x32xf32>
    %170 = arith.addf %167, %169 : vector<8x32xf32>
    %171 = vector.extract_strided_slice %163 {offsets = [0, 64], sizes = [8, 32], strides = [1, 1]} : vector<8x96xf32> to vector<8x32xf32>
    %172 = math.tanh %170 : vector<8x32xf32>
    %173 = arith.mulf %171, %172 : vector<8x32xf32>
    %c56_55 = arith.constant 56 : index
    %c0_56 = arith.constant 0 : index
    %174 = vector.load %arg13[%c56_55, %c0_56] : memref<64x32xf32, #tpu.memory_space<vmem>>, vector<8x32xf32>
    tpu.vector_store %arg13[%c56_55, %c0_56], %173 {strides = array<i32>} : memref<64x32xf32, #tpu.memory_space<vmem>>, vector<8x32xf32>,
    %c0_57 = arith.constant 0 : index
    %c0_58 = arith.constant 0 : index
    %c0_59 = arith.constant 0 : index
    %175 = vector.load %arg11[%c0_57, %c0_58, %c0_59] : memref<2x8x32xf32, #tpu.memory_space<vmem>>, vector<1x8x32xf32>
    %176 = vector.shape_cast %175 : vector<1x8x32xf32> to vector<8x32xf32>
    %177 = vector.shape_cast %173 : vector<8x32xf32> to vector<1x8x32xf32>
    tpu.vector_store %arg11[%c0_57, %c0_58, %c0_59], %177 {strides = array<i32>} : memref<2x8x32xf32, #tpu.memory_space<vmem>>, vector<1x8x32xf32>,
    %c0_60 = arith.constant 0 : index
    %c0_61 = arith.constant 0 : index
    %c0_62 = arith.constant 0 : index
    %178 = vector.load %arg12[%c0_60, %c0_61, %c0_62] : memref<2x8x32xf32, #tpu.memory_space<vmem>>, vector<1x8x32xf32>
    %179 = vector.shape_cast %178 : vector<1x8x32xf32> to vector<8x32xf32>
    %180 = vector.shape_cast %170 : vector<8x32xf32> to vector<1x8x32xf32>
    tpu.vector_store %arg12[%c0_60, %c0_61, %c0_62], %180 {strides = array<i32>} : memref<2x8x32xf32, #tpu.memory_space<vmem>>, vector<1x8x32xf32>,
    %c0_63 = arith.constant 0 : index
    %c0_64 = arith.constant 0 : index
    %181 = vector.load %arg13[%c0_63, %c0_64] : memref<64x32xf32, #tpu.memory_space<vmem>>, vector<64x32xf32>
    %c0_65 = arith.constant 0 : index
    %c0_66 = arith.constant 0 : index
    %182 = vector.load %arg5[%c0_65, %c0_66] : memref<32x128xf32, #tpu.memory_space<vmem>>, vector<32x128xf32>
    %cst_67 = arith.constant dense<0.000000e+00> : vector<64x128xf32>
    %183 = tpu.matmul %181, %182, %cst_67 {dimension_numbers = #tpu.dot_dimension_numbers<[1], [0], [0], [1], [0, 0, 1, 1], [], []>} : vector<64x32xf32>, vector<32x128xf32>, vector<64x128xf32> -> vector<64x128xf32>
    %c0_68 = arith.constant 0 : index
    %c0_69 = arith.constant 0 : index
    %184 = vector.load %arg7[%c0_68, %c0_69] : memref<1x128xf32, #tpu.memory_space<vmem>>, vector<1x128xf32>
    %185 = vector.broadcast %184 : vector<1x128xf32> to vector<64x128xf32>
    %186 = arith.addf %183, %185 : vector<64x128xf32>
    %c0_70 = arith.constant 0 : index
    %c0_71 = arith.constant 0 : index
    %187 = vector.load %arg14[%c0_70, %c0_71] : memref<64x128xf32, #tpu.memory_space<vmem>>, vector<64x128xf32>
    tpu.vector_store %arg14[%c0_70, %c0_71], %186 {strides = array<i32>} : memref<64x128xf32, #tpu.memory_space<vmem>>, vector<64x128xf32>,
    %c0_72 = arith.constant 0 : index
    %c0_73 = arith.constant 0 : index
    %188 = vector.load %arg6[%c0_72, %c0_73] : memref<32x128xf32, #tpu.memory_space<vmem>>, vector<32x128xf32>
    %c1 = arith.constant 1 : index
    %c0_74 = arith.constant 0 : index
    %c0_75 = arith.constant 0 : index
    %189 = vector.load %arg11[%c1, %c0_74, %c0_75] : memref<2x8x32xf32, #tpu.memory_space<vmem>>, vector<1x8x32xf32>
    %190 = vector.shape_cast %189 : vector<1x8x32xf32> to vector<8x32xf32>
    %c1_76 = arith.constant 1 : index
    %c0_77 = arith.constant 0 : index
    %c0_78 = arith.constant 0 : index
    %191 = vector.load %arg12[%c1_76, %c0_77, %c0_78] : memref<2x8x32xf32, #tpu.memory_space<vmem>>, vector<1x8x32xf32>
    %192 = vector.shape_cast %191 : vector<1x8x32xf32> to vector<8x32xf32>
    %c0_79 = arith.constant 0 : index
    %c0_80 = arith.constant 0 : index
    %193 = vector.load %arg14[%c0_79, %c0_80] : memref<64x128xf32, #tpu.memory_space<vmem>>, vector<8x128xf32>
    %cst_81 = arith.constant dense<0.000000e+00> : vector<8x128xf32>
    %194 = tpu.matmul %190, %188, %cst_81 {dimension_numbers = #tpu.dot_dimension_numbers<[1], [0], [0], [1], [0, 0, 1, 1], [], []>} : vector<8x32xf32>, vector<32x128xf32>, vector<8x128xf32> -> vector<8x128xf32>
    %195 = arith.addf %193, %194 : vector<8x128xf32>
    %196 = vector.extract_strided_slice %195 {offsets = [0, 0], sizes = [8, 96], strides = [1, 1]} : vector<8x128xf32> to vector<8x96xf32>
    %197 = arith.negf %196 : vector<8x96xf32>
    %198 = math.exp %197 : vector<8x96xf32>
    %cst_82 = arith.constant 1.000000e+00 : f32
    %199 = vector.broadcast %cst_82 : f32 to vector<8x96xf32>
    %200 = arith.addf %199, %198 : vector<8x96xf32>
    %201 = arith.divf %199, %200 : vector<8x96xf32>
    %202 = vector.extract_strided_slice %195 {offsets = [0, 96], sizes = [8, 32], strides = [1, 1]} : vector<8x128xf32> to vector<8x32xf32>
    %203 = math.tanh %202 : vector<8x32xf32>
    %204 = vector.extract_strided_slice %201 {offsets = [0, 32], sizes = [8, 32], strides = [1, 1]} : vector<8x96xf32> to vector<8x32xf32>
    %205 = arith.mulf %204, %192 : vector<8x32xf32>
    %206 = vector.extract_strided_slice %201 {offsets = [0, 0], sizes = [8, 32], strides = [1, 1]} : vector<8x96xf32> to vector<8x32xf32>
    %207 = arith.mulf %206, %203 : vector<8x32xf32>
    %208 = arith.addf %205, %207 : vector<8x32xf32>
    %209 = vector.extract_strided_slice %201 {offsets = [0, 64], sizes = [8, 32], strides = [1, 1]} : vector<8x96xf32> to vector<8x32xf32>
    %210 = math.tanh %208 : vector<8x32xf32>
    %211 = arith.mulf %209, %210 : vector<8x32xf32>
    %c0_83 = arith.constant 0 : index
    %c0_84 = arith.constant 0 : index
    %212 = vector.load %arg13[%c0_83, %c0_84] : memref<64x32xf32, #tpu.memory_space<vmem>>, vector<8x32xf32>
    tpu.vector_store %arg13[%c0_83, %c0_84], %211 {strides = array<i32>} : memref<64x32xf32, #tpu.memory_space<vmem>>, vector<8x32xf32>,
    %c8_85 = arith.constant 8 : index
    %c0_86 = arith.constant 0 : index
    %213 = vector.load %arg14[%c8_85, %c0_86] : memref<64x128xf32, #tpu.memory_space<vmem>>, vector<8x128xf32>
    %cst_87 = arith.constant dense<0.000000e+00> : vector<8x128xf32>
    %214 = tpu.matmul %211, %188, %cst_87 {dimension_numbers = #tpu.dot_dimension_numbers<[1], [0], [0], [1], [0, 0, 1, 1], [], []>} : vector<8x32xf32>, vector<32x128xf32>, vector<8x128xf32> -> vector<8x128xf32>
    %215 = arith.addf %213, %214 : vector<8x128xf32>
    %216 = vector.extract_strided_slice %215 {offsets = [0, 0], sizes = [8, 96], strides = [1, 1]} : vector<8x128xf32> to vector<8x96xf32>
    %217 = arith.negf %216 : vector<8x96xf32>
    %218 = math.exp %217 : vector<8x96xf32>
    %cst_88 = arith.constant 1.000000e+00 : f32
    %219 = vector.broadcast %cst_88 : f32 to vector<8x96xf32>
    %220 = arith.addf %219, %218 : vector<8x96xf32>
    %221 = arith.divf %219, %220 : vector<8x96xf32>
    %222 = vector.extract_strided_slice %215 {offsets = [0, 96], sizes = [8, 32], strides = [1, 1]} : vector<8x128xf32> to vector<8x32xf32>
    %223 = math.tanh %222 : vector<8x32xf32>
    %224 = vector.extract_strided_slice %221 {offsets = [0, 32], sizes = [8, 32], strides = [1, 1]} : vector<8x96xf32> to vector<8x32xf32>
    %225 = arith.mulf %224, %208 : vector<8x32xf32>
    %226 = vector.extract_strided_slice %221 {offsets = [0, 0], sizes = [8, 32], strides = [1, 1]} : vector<8x96xf32> to vector<8x32xf32>
    %227 = arith.mulf %226, %223 : vector<8x32xf32>
    %228 = arith.addf %225, %227 : vector<8x32xf32>
    %229 = vector.extract_strided_slice %221 {offsets = [0, 64], sizes = [8, 32], strides = [1, 1]} : vector<8x96xf32> to vector<8x32xf32>
    %230 = math.tanh %228 : vector<8x32xf32>
    %231 = arith.mulf %229, %230 : vector<8x32xf32>
    %c8_89 = arith.constant 8 : index
    %c0_90 = arith.constant 0 : index
    %232 = vector.load %arg13[%c8_89, %c0_90] : memref<64x32xf32, #tpu.memory_space<vmem>>, vector<8x32xf32>
    tpu.vector_store %arg13[%c8_89, %c0_90], %231 {strides = array<i32>} : memref<64x32xf32, #tpu.memory_space<vmem>>, vector<8x32xf32>,
    %c16_91 = arith.constant 16 : index
    %c0_92 = arith.constant 0 : index
    %233 = vector.load %arg14[%c16_91, %c0_92] : memref<64x128xf32, #tpu.memory_space<vmem>>, vector<8x128xf32>
    %cst_93 = arith.constant dense<0.000000e+00> : vector<8x128xf32>
    %234 = tpu.matmul %231, %188, %cst_93 {dimension_numbers = #tpu.dot_dimension_numbers<[1], [0], [0], [1], [0, 0, 1, 1], [], []>} : vector<8x32xf32>, vector<32x128xf32>, vector<8x128xf32> -> vector<8x128xf32>
    %235 = arith.addf %233, %234 : vector<8x128xf32>
    %236 = vector.extract_strided_slice %235 {offsets = [0, 0], sizes = [8, 96], strides = [1, 1]} : vector<8x128xf32> to vector<8x96xf32>
    %237 = arith.negf %236 : vector<8x96xf32>
    %238 = math.exp %237 : vector<8x96xf32>
    %cst_94 = arith.constant 1.000000e+00 : f32
    %239 = vector.broadcast %cst_94 : f32 to vector<8x96xf32>
    %240 = arith.addf %239, %238 : vector<8x96xf32>
    %241 = arith.divf %239, %240 : vector<8x96xf32>
    %242 = vector.extract_strided_slice %235 {offsets = [0, 96], sizes = [8, 32], strides = [1, 1]} : vector<8x128xf32> to vector<8x32xf32>
    %243 = math.tanh %242 : vector<8x32xf32>
    %244 = vector.extract_strided_slice %241 {offsets = [0, 32], sizes = [8, 32], strides = [1, 1]} : vector<8x96xf32> to vector<8x32xf32>
    %245 = arith.mulf %244, %228 : vector<8x32xf32>
    %246 = vector.extract_strided_slice %241 {offsets = [0, 0], sizes = [8, 32], strides = [1, 1]} : vector<8x96xf32> to vector<8x32xf32>
    %247 = arith.mulf %246, %243 : vector<8x32xf32>
    %248 = arith.addf %245, %247 : vector<8x32xf32>
    %249 = vector.extract_strided_slice %241 {offsets = [0, 64], sizes = [8, 32], strides = [1, 1]} : vector<8x96xf32> to vector<8x32xf32>
    %250 = math.tanh %248 : vector<8x32xf32>
    %251 = arith.mulf %249, %250 : vector<8x32xf32>
    %c16_95 = arith.constant 16 : index
    %c0_96 = arith.constant 0 : index
    %252 = vector.load %arg13[%c16_95, %c0_96] : memref<64x32xf32, #tpu.memory_space<vmem>>, vector<8x32xf32>
    tpu.vector_store %arg13[%c16_95, %c0_96], %251 {strides = array<i32>} : memref<64x32xf32, #tpu.memory_space<vmem>>, vector<8x32xf32>,
    %c24_97 = arith.constant 24 : index
    %c0_98 = arith.constant 0 : index
    %253 = vector.load %arg14[%c24_97, %c0_98] : memref<64x128xf32, #tpu.memory_space<vmem>>, vector<8x128xf32>
    %cst_99 = arith.constant dense<0.000000e+00> : vector<8x128xf32>
    %254 = tpu.matmul %251, %188, %cst_99 {dimension_numbers = #tpu.dot_dimension_numbers<[1], [0], [0], [1], [0, 0, 1, 1], [], []>} : vector<8x32xf32>, vector<32x128xf32>, vector<8x128xf32> -> vector<8x128xf32>
    %255 = arith.addf %253, %254 : vector<8x128xf32>
    %256 = vector.extract_strided_slice %255 {offsets = [0, 0], sizes = [8, 96], strides = [1, 1]} : vector<8x128xf32> to vector<8x96xf32>
    %257 = arith.negf %256 : vector<8x96xf32>
    %258 = math.exp %257 : vector<8x96xf32>
    %cst_100 = arith.constant 1.000000e+00 : f32
    %259 = vector.broadcast %cst_100 : f32 to vector<8x96xf32>
    %260 = arith.addf %259, %258 : vector<8x96xf32>
    %261 = arith.divf %259, %260 : vector<8x96xf32>
    %262 = vector.extract_strided_slice %255 {offsets = [0, 96], sizes = [8, 32], strides = [1, 1]} : vector<8x128xf32> to vector<8x32xf32>
    %263 = math.tanh %262 : vector<8x32xf32>
    %264 = vector.extract_strided_slice %261 {offsets = [0, 32], sizes = [8, 32], strides = [1, 1]} : vector<8x96xf32> to vector<8x32xf32>
    %265 = arith.mulf %264, %248 : vector<8x32xf32>
    %266 = vector.extract_strided_slice %261 {offsets = [0, 0], sizes = [8, 32], strides = [1, 1]} : vector<8x96xf32> to vector<8x32xf32>
    %267 = arith.mulf %266, %263 : vector<8x32xf32>
    %268 = arith.addf %265, %267 : vector<8x32xf32>
    %269 = vector.extract_strided_slice %261 {offsets = [0, 64], sizes = [8, 32], strides = [1, 1]} : vector<8x96xf32> to vector<8x32xf32>
    %270 = math.tanh %268 : vector<8x32xf32>
    %271 = arith.mulf %269, %270 : vector<8x32xf32>
    %c24_101 = arith.constant 24 : index
    %c0_102 = arith.constant 0 : index
    %272 = vector.load %arg13[%c24_101, %c0_102] : memref<64x32xf32, #tpu.memory_space<vmem>>, vector<8x32xf32>
    tpu.vector_store %arg13[%c24_101, %c0_102], %271 {strides = array<i32>} : memref<64x32xf32, #tpu.memory_space<vmem>>, vector<8x32xf32>,
    %c32_103 = arith.constant 32 : index
    %c0_104 = arith.constant 0 : index
    %273 = vector.load %arg14[%c32_103, %c0_104] : memref<64x128xf32, #tpu.memory_space<vmem>>, vector<8x128xf32>
    %cst_105 = arith.constant dense<0.000000e+00> : vector<8x128xf32>
    %274 = tpu.matmul %271, %188, %cst_105 {dimension_numbers = #tpu.dot_dimension_numbers<[1], [0], [0], [1], [0, 0, 1, 1], [], []>} : vector<8x32xf32>, vector<32x128xf32>, vector<8x128xf32> -> vector<8x128xf32>
    %275 = arith.addf %273, %274 : vector<8x128xf32>
    %276 = vector.extract_strided_slice %275 {offsets = [0, 0], sizes = [8, 96], strides = [1, 1]} : vector<8x128xf32> to vector<8x96xf32>
    %277 = arith.negf %276 : vector<8x96xf32>
    %278 = math.exp %277 : vector<8x96xf32>
    %cst_106 = arith.constant 1.000000e+00 : f32
    %279 = vector.broadcast %cst_106 : f32 to vector<8x96xf32>
    %280 = arith.addf %279, %278 : vector<8x96xf32>
    %281 = arith.divf %279, %280 : vector<8x96xf32>
    %282 = vector.extract_strided_slice %275 {offsets = [0, 96], sizes = [8, 32], strides = [1, 1]} : vector<8x128xf32> to vector<8x32xf32>
    %283 = math.tanh %282 : vector<8x32xf32>
    %284 = vector.extract_strided_slice %281 {offsets = [0, 32], sizes = [8, 32], strides = [1, 1]} : vector<8x96xf32> to vector<8x32xf32>
    %285 = arith.mulf %284, %268 : vector<8x32xf32>
    %286 = vector.extract_strided_slice %281 {offsets = [0, 0], sizes = [8, 32], strides = [1, 1]} : vector<8x96xf32> to vector<8x32xf32>
    %287 = arith.mulf %286, %283 : vector<8x32xf32>
    %288 = arith.addf %285, %287 : vector<8x32xf32>
    %289 = vector.extract_strided_slice %281 {offsets = [0, 64], sizes = [8, 32], strides = [1, 1]} : vector<8x96xf32> to vector<8x32xf32>
    %290 = math.tanh %288 : vector<8x32xf32>
    %291 = arith.mulf %289, %290 : vector<8x32xf32>
    %c32_107 = arith.constant 32 : index
    %c0_108 = arith.constant 0 : index
    %292 = vector.load %arg13[%c32_107, %c0_108] : memref<64x32xf32, #tpu.memory_space<vmem>>, vector<8x32xf32>
    tpu.vector_store %arg13[%c32_107, %c0_108], %291 {strides = array<i32>} : memref<64x32xf32, #tpu.memory_space<vmem>>, vector<8x32xf32>,
    %c40_109 = arith.constant 40 : index
    %c0_110 = arith.constant 0 : index
    %293 = vector.load %arg14[%c40_109, %c0_110] : memref<64x128xf32, #tpu.memory_space<vmem>>, vector<8x128xf32>
    %cst_111 = arith.constant dense<0.000000e+00> : vector<8x128xf32>
    %294 = tpu.matmul %291, %188, %cst_111 {dimension_numbers = #tpu.dot_dimension_numbers<[1], [0], [0], [1], [0, 0, 1, 1], [], []>} : vector<8x32xf32>, vector<32x128xf32>, vector<8x128xf32> -> vector<8x128xf32>
    %295 = arith.addf %293, %294 : vector<8x128xf32>
    %296 = vector.extract_strided_slice %295 {offsets = [0, 0], sizes = [8, 96], strides = [1, 1]} : vector<8x128xf32> to vector<8x96xf32>
    %297 = arith.negf %296 : vector<8x96xf32>
    %298 = math.exp %297 : vector<8x96xf32>
    %cst_112 = arith.constant 1.000000e+00 : f32
    %299 = vector.broadcast %cst_112 : f32 to vector<8x96xf32>
    %300 = arith.addf %299, %298 : vector<8x96xf32>
    %301 = arith.divf %299, %300 : vector<8x96xf32>
    %302 = vector.extract_strided_slice %295 {offsets = [0, 96], sizes = [8, 32], strides = [1, 1]} : vector<8x128xf32> to vector<8x32xf32>
    %303 = math.tanh %302 : vector<8x32xf32>
    %304 = vector.extract_strided_slice %301 {offsets = [0, 32], sizes = [8, 32], strides = [1, 1]} : vector<8x96xf32> to vector<8x32xf32>
    %305 = arith.mulf %304, %288 : vector<8x32xf32>
    %306 = vector.extract_strided_slice %301 {offsets = [0, 0], sizes = [8, 32], strides = [1, 1]} : vector<8x96xf32> to vector<8x32xf32>
    %307 = arith.mulf %306, %303 : vector<8x32xf32>
    %308 = arith.addf %305, %307 : vector<8x32xf32>
    %309 = vector.extract_strided_slice %301 {offsets = [0, 64], sizes = [8, 32], strides = [1, 1]} : vector<8x96xf32> to vector<8x32xf32>
    %310 = math.tanh %308 : vector<8x32xf32>
    %311 = arith.mulf %309, %310 : vector<8x32xf32>
    %c40_113 = arith.constant 40 : index
    %c0_114 = arith.constant 0 : index
    %312 = vector.load %arg13[%c40_113, %c0_114] : memref<64x32xf32, #tpu.memory_space<vmem>>, vector<8x32xf32>
    tpu.vector_store %arg13[%c40_113, %c0_114], %311 {strides = array<i32>} : memref<64x32xf32, #tpu.memory_space<vmem>>, vector<8x32xf32>,
    %c48_115 = arith.constant 48 : index
    %c0_116 = arith.constant 0 : index
    %313 = vector.load %arg14[%c48_115, %c0_116] : memref<64x128xf32, #tpu.memory_space<vmem>>, vector<8x128xf32>
    %cst_117 = arith.constant dense<0.000000e+00> : vector<8x128xf32>
    %314 = tpu.matmul %311, %188, %cst_117 {dimension_numbers = #tpu.dot_dimension_numbers<[1], [0], [0], [1], [0, 0, 1, 1], [], []>} : vector<8x32xf32>, vector<32x128xf32>, vector<8x128xf32> -> vector<8x128xf32>
    %315 = arith.addf %313, %314 : vector<8x128xf32>
    %316 = vector.extract_strided_slice %315 {offsets = [0, 0], sizes = [8, 96], strides = [1, 1]} : vector<8x128xf32> to vector<8x96xf32>
    %317 = arith.negf %316 : vector<8x96xf32>
    %318 = math.exp %317 : vector<8x96xf32>
    %cst_118 = arith.constant 1.000000e+00 : f32
    %319 = vector.broadcast %cst_118 : f32 to vector<8x96xf32>
    %320 = arith.addf %319, %318 : vector<8x96xf32>
    %321 = arith.divf %319, %320 : vector<8x96xf32>
    %322 = vector.extract_strided_slice %315 {offsets = [0, 96], sizes = [8, 32], strides = [1, 1]} : vector<8x128xf32> to vector<8x32xf32>
    %323 = math.tanh %322 : vector<8x32xf32>
    %324 = vector.extract_strided_slice %321 {offsets = [0, 32], sizes = [8, 32], strides = [1, 1]} : vector<8x96xf32> to vector<8x32xf32>
    %325 = arith.mulf %324, %308 : vector<8x32xf32>
    %326 = vector.extract_strided_slice %321 {offsets = [0, 0], sizes = [8, 32], strides = [1, 1]} : vector<8x96xf32> to vector<8x32xf32>
    %327 = arith.mulf %326, %323 : vector<8x32xf32>
    %328 = arith.addf %325, %327 : vector<8x32xf32>
    %329 = vector.extract_strided_slice %321 {offsets = [0, 64], sizes = [8, 32], strides = [1, 1]} : vector<8x96xf32> to vector<8x32xf32>
    %330 = math.tanh %328 : vector<8x32xf32>
    %331 = arith.mulf %329, %330 : vector<8x32xf32>
    %c48_119 = arith.constant 48 : index
    %c0_120 = arith.constant 0 : index
    %332 = vector.load %arg13[%c48_119, %c0_120] : memref<64x32xf32, #tpu.memory_space<vmem>>, vector<8x32xf32>
    tpu.vector_store %arg13[%c48_119, %c0_120], %331 {strides = array<i32>} : memref<64x32xf32, #tpu.memory_space<vmem>>, vector<8x32xf32>,
    %c56_121 = arith.constant 56 : index
    %c0_122 = arith.constant 0 : index
    %333 = vector.load %arg14[%c56_121, %c0_122] : memref<64x128xf32, #tpu.memory_space<vmem>>, vector<8x128xf32>
    %cst_123 = arith.constant dense<0.000000e+00> : vector<8x128xf32>
    %334 = tpu.matmul %331, %188, %cst_123 {dimension_numbers = #tpu.dot_dimension_numbers<[1], [0], [0], [1], [0, 0, 1, 1], [], []>} : vector<8x32xf32>, vector<32x128xf32>, vector<8x128xf32> -> vector<8x128xf32>
    %335 = arith.addf %333, %334 : vector<8x128xf32>
    %336 = vector.extract_strided_slice %335 {offsets = [0, 0], sizes = [8, 96], strides = [1, 1]} : vector<8x128xf32> to vector<8x96xf32>
    %337 = arith.negf %336 : vector<8x96xf32>
    %338 = math.exp %337 : vector<8x96xf32>
    %cst_124 = arith.constant 1.000000e+00 : f32
    %339 = vector.broadcast %cst_124 : f32 to vector<8x96xf32>
    %340 = arith.addf %339, %338 : vector<8x96xf32>
    %341 = arith.divf %339, %340 : vector<8x96xf32>
    %342 = vector.extract_strided_slice %335 {offsets = [0, 96], sizes = [8, 32], strides = [1, 1]} : vector<8x128xf32> to vector<8x32xf32>
    %343 = math.tanh %342 : vector<8x32xf32>
    %344 = vector.extract_strided_slice %341 {offsets = [0, 32], sizes = [8, 32], strides = [1, 1]} : vector<8x96xf32> to vector<8x32xf32>
    %345 = arith.mulf %344, %328 : vector<8x32xf32>
    %346 = vector.extract_strided_slice %341 {offsets = [0, 0], sizes = [8, 32], strides = [1, 1]} : vector<8x96xf32> to vector<8x32xf32>
    %347 = arith.mulf %346, %343 : vector<8x32xf32>
    %348 = arith.addf %345, %347 : vector<8x32xf32>
    %349 = vector.extract_strided_slice %341 {offsets = [0, 64], sizes = [8, 32], strides = [1, 1]} : vector<8x96xf32> to vector<8x32xf32>
    %350 = math.tanh %348 : vector<8x32xf32>
    %351 = arith.mulf %349, %350 : vector<8x32xf32>
    %c56_125 = arith.constant 56 : index
    %c0_126 = arith.constant 0 : index
    %352 = vector.load %arg13[%c56_125, %c0_126] : memref<64x32xf32, #tpu.memory_space<vmem>>, vector<8x32xf32>
    tpu.vector_store %arg13[%c56_125, %c0_126], %351 {strides = array<i32>} : memref<64x32xf32, #tpu.memory_space<vmem>>, vector<8x32xf32>,
    %c1_127 = arith.constant 1 : index
    %c0_128 = arith.constant 0 : index
    %c0_129 = arith.constant 0 : index
    %353 = vector.load %arg11[%c1_127, %c0_128, %c0_129] : memref<2x8x32xf32, #tpu.memory_space<vmem>>, vector<1x8x32xf32>
    %354 = vector.shape_cast %353 : vector<1x8x32xf32> to vector<8x32xf32>
    %355 = vector.shape_cast %351 : vector<8x32xf32> to vector<1x8x32xf32>
    tpu.vector_store %arg11[%c1_127, %c0_128, %c0_129], %355 {strides = array<i32>} : memref<2x8x32xf32, #tpu.memory_space<vmem>>, vector<1x8x32xf32>,
    %c1_130 = arith.constant 1 : index
    %c0_131 = arith.constant 0 : index
    %c0_132 = arith.constant 0 : index
    %356 = vector.load %arg12[%c1_130, %c0_131, %c0_132] : memref<2x8x32xf32, #tpu.memory_space<vmem>>, vector<1x8x32xf32>
    %357 = vector.shape_cast %356 : vector<1x8x32xf32> to vector<8x32xf32>
    %358 = vector.shape_cast %348 : vector<8x32xf32> to vector<1x8x32xf32>
    tpu.vector_store %arg12[%c1_130, %c0_131, %c0_132], %358 {strides = array<i32>} : memref<2x8x32xf32, #tpu.memory_space<vmem>>, vector<1x8x32xf32>,
    %c0_133 = arith.constant 0 : index
    %c0_134 = arith.constant 0 : index
    %359 = vector.load %arg13[%c0_133, %c0_134] : memref<64x32xf32, #tpu.memory_space<vmem>>, vector<64x32xf32>
    %c0_135 = arith.constant 0 : index
    %c0_136 = arith.constant 0 : index
    %360 = vector.load %arg8[%c0_135, %c0_136] : memref<32x128xf32, #tpu.memory_space<vmem>>, vector<32x128xf32>
    %cst_137 = arith.constant dense<0.000000e+00> : vector<64x128xf32>
    %361 = tpu.matmul %359, %360, %cst_137 {dimension_numbers = #tpu.dot_dimension_numbers<[1], [0], [0], [1], [0, 0, 1, 1], [], []>} : vector<64x32xf32>, vector<32x128xf32>, vector<64x128xf32> -> vector<64x128xf32>
    %c0_138 = arith.constant 0 : index
    %c0_139 = arith.constant 0 : index
    %362 = vector.load %arg9[%c0_138, %c0_139] : memref<1x128xf32, #tpu.memory_space<vmem>>, vector<1x128xf32>
    %363 = vector.broadcast %362 : vector<1x128xf32> to vector<64x128xf32>
    %364 = arith.addf %361, %363 : vector<64x128xf32>
    %c0_140 = arith.constant 0 : index
    %c0_141 = arith.constant 0 : index
    %365 = vector.load %arg10[%c0_140, %c0_141] : memref<64x128xf32, #tpu.memory_space<vmem>>, vector<64x128xf32>
    tpu.vector_store %arg10[%c0_140, %c0_141], %364 {strides = array<i32>} : memref<64x128xf32, #tpu.memory_space<vmem>>, vector<64x128xf32>,
    return
  }
  func.func @transform_0(%arg0: i32) -> (i32, i32) {
    %c0_i32 = arith.constant 0 : i32
    %c0_i32_0 = arith.constant 0 : i32
    return %arg0, %c0_i32 : i32, i32
  }
  func.func @transform_1(%arg0: i32) -> (i32, i32) {
    %c0_i32 = arith.constant 0 : i32
    %c0_i32_0 = arith.constant 0 : i32
    %c0_i32_1 = arith.constant 0 : i32
    return %c0_i32, %c0_i32_0 : i32, i32
  }
  func.func @transform_2(%arg0: i32) -> (i32, i32) {
    %c0_i32 = arith.constant 0 : i32
    %c0_i32_0 = arith.constant 0 : i32
    %c0_i32_1 = arith.constant 0 : i32
    return %c0_i32, %c0_i32_0 : i32, i32
  }
  func.func @transform_3(%arg0: i32) -> (i32, i32) {
    %c0_i32 = arith.constant 0 : i32
    %c0_i32_0 = arith.constant 0 : i32
    %c0_i32_1 = arith.constant 0 : i32
    return %c0_i32, %c0_i32_0 : i32, i32
  }
  func.func @transform_4(%arg0: i32) -> (i32, i32) {
    %c0_i32 = arith.constant 0 : i32
    %c0_i32_0 = arith.constant 0 : i32
    %c0_i32_1 = arith.constant 0 : i32
    return %c0_i32, %c0_i32_0 : i32, i32
  }
  func.func @transform_5(%arg0: i32) -> (i32, i32) {
    %c0_i32 = arith.constant 0 : i32
    %c0_i32_0 = arith.constant 0 : i32
    %c0_i32_1 = arith.constant 0 : i32
    return %c0_i32, %c0_i32_0 : i32, i32
  }
  func.func @transform_6(%arg0: i32) -> (i32, i32) {
    %c0_i32 = arith.constant 0 : i32
    %c0_i32_0 = arith.constant 0 : i32
    %c0_i32_1 = arith.constant 0 : i32
    return %c0_i32, %c0_i32_0 : i32, i32
  }
  func.func @transform_7(%arg0: i32) -> (i32, i32) {
    %c0_i32 = arith.constant 0 : i32
    %c0_i32_0 = arith.constant 0 : i32
    %c0_i32_1 = arith.constant 0 : i32
    return %c0_i32, %c0_i32_0 : i32, i32
  }
  func.func @transform_8(%arg0: i32) -> (i32, i32) {
    %c0_i32 = arith.constant 0 : i32
    %c0_i32_0 = arith.constant 0 : i32
    %c0_i32_1 = arith.constant 0 : i32
    return %c0_i32, %c0_i32_0 : i32, i32
  }
  func.func @transform_9(%arg0: i32) -> (i32, i32) {
    %c0_i32 = arith.constant 0 : i32
    %c0_i32_0 = arith.constant 0 : i32
    return %arg0, %c0_i32 : i32, i32
  }
}

</mosaic_0001>

<llo_original>
// kernel: tpu_custom_call.1
$region0: #{tpu_custom_call.1}
  #allocation0 [shape = 'u32[]', space=smem, size = 0x4, offset = 0x4, fixed_abs, tag = 'smem constant byte address 0x4 - core index']
  #allocation1 [shape = 'u32[144,128]{1,0:T(1,128)}', space=vmem, size = 0x12000, scoped, tag = 'internal scratch']
  #allocation2 [shape = 'f32[2,8,32]{2,1,0:T(8,128)}', space=vmem, size = 0x2000, scoped, tag = 'scratch operand']
  #allocation3 [shape = 'f32[2,8,32]{2,1,0:T(8,128)}', space=vmem, size = 0x2000, scoped, tag = 'scratch operand']
  #allocation4 [shape = 'f32[64,32]{1,0:T(8,128)}', space=vmem, size = 0x8000, scoped, tag = 'scratch operand']
  #allocation5 [shape = 'f32[64,128]{1,0:T(8,128)}', space=vmem, size = 0x8000, scoped, tag = 'scratch operand']
  %s0 = inlined_call_operand.vmem [shape: f32[64,16], index: 0, kind: input, shape index: {}]
  %s1 = inlined_call_operand.hbm [shape: f32[16,128], index: 1, kind: input, shape index: {}]
  %s2 = inlined_call_operand.vmem [shape: f32[32,128], index: 2, kind: input, shape index: {}]
  %s3 = inlined_call_operand.vmem [shape: f32[1,128], index: 3, kind: input, shape index: {}]
  %s4 = inlined_call_operand.vmem [shape: f32[32,128], index: 4, kind: input, shape index: {}]
  %s5 = inlined_call_operand.vmem [shape: f32[32,128], index: 5, kind: input, shape index: {}]
  %s6 = inlined_call_operand.vmem [shape: f32[1,128], index: 6, kind: input, shape index: {}]
  %s7 = inlined_call_operand.hbm [shape: f32[32,128], index: 7, kind: input, shape index: {}]
  %s8 = inlined_call_operand.vmem [shape: f32[1,128], index: 8, kind: input, shape index: {}]
  %s9 = inlined_call_operand.hbm [shape: f32[64,128], index: 9, kind: output, shape index: {}]
  %s10 = sld [smem:[#allocation0]]
  $region58: #{tpu_custom_call.1} parent=0
    _
  %s12 = ssub.s32 1, %s10
  %s13 = scalar_select 0, %s12, %s10
  $region1: #{tpu_custom_call.1} parent=0
    #allocation6 [shape = 'u8[8192]{0}', space=vmem, size = 0x2000, scoped, tag = 'input window, operand 1, single buffered']
    #allocation7 [shape = 's32[1]{0}', space=sflag, size = 0x4, scoped, tag = 'scoped memory for tpu_custom_call.1']
    #allocation8 [shape = 's32[1]{0}', space=sflag, size = 0x4, scoped, tag = 'scoped memory for tpu_custom_call.1']
    #allocation9 [shape = 'u8[16384]{0}', space=vmem, size = 0x4000, scoped, tag = 'input window, operand 7, single buffered']
    #allocation10 [shape = 's32[1]{0}', space=sflag, size = 0x4, scoped, tag = 'scoped memory for tpu_custom_call.1']
    #allocation11 [shape = 'u8[32768]{0}', space=vmem, size = 0x8000, scoped, tag = 'output window, operand 0, single buffered']
    %14 = vsyncpa [#allocation7], 0
    %15 = vsyncpa [#allocation10], 0
    %16 = vsyncpa [#allocation8], 0
    // Predicated region
    $region2: #{tpu_custom_call.1} parent=1 // pred_check
      _
    $region3: #{tpu_custom_call.1} parent=1 // pred_check_branch
      %18 = sbr.rel (0) target = $region5
    $region4: #{tpu_custom_call.1} parent=1 // pred_region
      _
    $region5: #{tpu_custom_call.1} parent=1 // pred_fallthru
      _
    // Predicated region
    $region6: #{tpu_custom_call.1} parent=1 // pred_check
      _
    $region7: #{tpu_custom_call.1} parent=1 // pred_check_branch
      %20 = sbr.rel (0) target = $region9
    $region8: #{tpu_custom_call.1} parent=1 // pred_region
      %s22 = ssub.s32 256, 256
      %23 = vsyncadd [#allocation7], %s22
      %s24 = sshll.u32 [#allocation6], 4
      %s25 = int_to_ptr.vmem [resolvable:$true] %s24
      %30 = dma.hbm_to_vmem [thread:$0]  %s1, 256, %s25, [#allocation7], 128, 128, 8
    $region9: #{tpu_custom_call.1} parent=1 // pred_fallthru
      _
    // Predicated region
    $region10: #{tpu_custom_call.1} parent=1 // pred_check
      _
    $region11: #{tpu_custom_call.1} parent=1 // pred_check_branch
      %32 = sbr.rel (0) target = $region13
    $region12: #{tpu_custom_call.1} parent=1 // pred_region
      _
    $region13: #{tpu_custom_call.1} parent=1 // pred_fallthru
      _
    // Predicated region
    $region14: #{tpu_custom_call.1} parent=1 // pred_check
      _
    $region15: #{tpu_custom_call.1} parent=1 // pred_check_branch
      %34 = sbr.rel (0) target = $region17
    $region16: #{tpu_custom_call.1} parent=1 // pred_region
      _
    $region17: #{tpu_custom_call.1} parent=1 // pred_fallthru
      _
    // Predicated region
    $region18: #{tpu_custom_call.1} parent=1 // pred_check
      _
    $region19: #{tpu_custom_call.1} parent=1 // pred_check_branch
      %36 = sbr.rel (0) target = $region21
    $region20: #{tpu_custom_call.1} parent=1 // pred_region
      _
    $region21: #{tpu_custom_call.1} parent=1 // pred_fallthru
      _
    // Predicated region
    $region22: #{tpu_custom_call.1} parent=1 // pred_check
      _
    $region23: #{tpu_custom_call.1} parent=1 // pred_check_branch
      %38 = sbr.rel (0) target = $region25
    $region24: #{tpu_custom_call.1} parent=1 // pred_region
      _
    $region25: #{tpu_custom_call.1} parent=1 // pred_fallthru
      _
    // Predicated region
    $region26: #{tpu_custom_call.1} parent=1 // pred_check
      _
    $region27: #{tpu_custom_call.1} parent=1 // pred_check_branch
      %40 = sbr.rel (0) target = $region29
    $region28: #{tpu_custom_call.1} parent=1 // pred_region
      _
    $region29: #{tpu_custom_call.1} parent=1 // pred_fallthru
      _
    // Predicated region
    $region30: #{tpu_custom_call.1} parent=1 // pred_check
      _
    $region31: #{tpu_custom_call.1} parent=1 // pred_check_branch
      %42 = sbr.rel (0) target = $region33
    $region32: #{tpu_custom_call.1} parent=1 // pred_region
      %s44 = ssub.s32 512, 512
      %45 = vsyncadd [#allocation10], %s44
      %s46 = sshll.u32 [#allocation9], 4
      %s47 = int_to_ptr.vmem [resolvable:$true] %s46
      %52 = dma.hbm_to_vmem [thread:$0]  %s7, 512, %s47, [#allocation10], 128, 128, 8
    $region33: #{tpu_custom_call.1} parent=1 // pred_fallthru
      _
    // Predicated region
    $region34: #{tpu_custom_call.1} parent=1 // pred_check
      _
    $region35: #{tpu_custom_call.1} parent=1 // pred_check_branch
      %54 = sbr.rel (0) target = $region37
    $region36: #{tpu_custom_call.1} parent=1 // pred_region
      _
    $region37: #{tpu_custom_call.1} parent=1 // pred_fallthru
      _
    // Predicated region
    $region38: #{tpu_custom_call.1} parent=1 // pred_check
      _
    $region39: #{tpu_custom_call.1} parent=1 // pred_check_branch
      %56 = sbr.rel (0) target = $region41
    $region40: #{tpu_custom_call.1} parent=1 // pred_region
      %57 = dma.done [#allocation7], 256
    $region41: #{tpu_custom_call.1} parent=1 // pred_fallthru
      _
    // Predicated region
    $region42: #{tpu_custom_call.1} parent=1 // pred_check
      _
    $region43: #{tpu_custom_call.1} parent=1 // pred_check_branch
      %59 = sbr.rel (0) target = $region45
    $region44: #{tpu_custom_call.1} parent=1 // pred_region
      %60 = dma.done [#allocation10], 512
    $region45: #{tpu_custom_call.1} parent=1 // pred_fallthru
      _
    %p61 = scmp.eq.s32.totalorder 0, 0
    // Predicated region
    $region46: #{tpu_custom_call.1} parent=1 // pred_check
      %p62 = pneg %p61
    $region47: #{tpu_custom_call.1} parent=1 // pred_check_branch
      %64 = sbr.rel (%p62) target = $region49
    $region48: #{tpu_custom_call.1} parent=1 // pred_region
      %vm65 = vcmask 261120
      %66 = vst.msk [vmem:[#allocation2] sm:$0xff] %vm65, 0.0
      %67 = vst.msk [vmem:[#allocation2 + $0x8] sm:$0xff] %vm65, 0.0
      %68 = vst.msk [vmem:[#allocation3] sm:$0xff] %vm65, 0.0
      %69 = vst.msk [vmem:[#allocation3 + $0x8] sm:$0xff] %vm65, 0.0
    $region49: #{tpu_custom_call.1} parent=1 // pred_fallthru
      _
    %v70 = vld [vmem:[%s0] sm:$0xff]
    %v71 = vld [vmem:[%s0 + $0x8] sm:$0xff]
    %v72 = vld [vmem:[%s0 + $0x10] sm:$0xff]
    %v73 = vld [vmem:[%s0 + $0x18] sm:$0xff]
    %v74 = vld [vmem:[%s0 + $0x20] sm:$0xff]
    %v75 = vld [vmem:[%s0 + $0x28] sm:$0xff]
    %v76 = vld [vmem:[%s0 + $0x30] sm:$0xff]
    %v77 = vld [vmem:[%s0 + $0x38] sm:$0xff]
    %v78 = vld [vmem:[#allocation6] sm:$0xff]
    %v79 = vld [vmem:[#allocation6 + $0x8] sm:$0xff]
    %v80 = vld [vmem:[%s3] sm:$0x1]
    %v82 = vlaneseq
    %v83 = vshrl.u32 %v82, 7
    %v84 = vsub.s32 0, %v83
    %v85 = vrot.slane %v80, %v84
    %vm87 = vcmask 130048
    %v89 = vsel %vm87, %v70, 0
    %v92 = vsel %vm87, %v71, 0
    %v95 = vsel %vm87, %v72, 0
    %v98 = vsel %vm87, %v73, 0
    %v101 = vsel %vm87, %v74, 0
    %v104 = vsel %vm87, %v75, 0
    %v107 = vsel %vm87, %v76, 0
    %v110 = vsel %vm87, %v77, 0
    %112 = vmatprep.subr.mxu0 0.0
    %113 = vmatpush1.msra.mxu0 %v78
    %114 = vmatprep.subr.mxu0 0.0
    %115 = vmatpush1.msra.mxu0 %v79
    %116 = vmatprep.subr.mxu0 0.0
    %117 = vmatpush1.msra.mxu0 0.0
    %118 = vmatprep.subr.mxu0 0.0
    %119 = vmatpush1.msra.mxu0 0.0
    %120 = vmatprep.subr.mxu0 0.0
    %121 = vmatpush1.msra.mxu0 0.0
    %122 = vmatprep.subr.mxu0 0.0
    %123 = vmatpush1.msra.mxu0 0.0
    %124 = vmatprep.subr.mxu0 0.0
    %125 = vmatpush1.msra.mxu0 0.0
    %126 = vmatprep.subr.mxu0 0.0
    %127 = vmatpush1.msra.mxu0 0.0
    %128 = vmatprep.subr.mxu0 0.0
    %129 = vmatpush1.msra.mxu0 0.0
    %130 = vmatprep.subr.mxu0 0.0
    %131 = vmatpush1.msra.mxu0 0.0
    %132 = vmatprep.subr.mxu0 0.0
    %133 = vmatpush1.msra.mxu0 0.0
    %134 = vmatprep.subr.mxu0 0.0
    %135 = vmatpush1.msra.mxu0 0.0
    %136 = vmatprep.subr.mxu0 0.0
    %137 = vmatpush1.msra.mxu0 0.0
    %138 = vmatprep.subr.mxu0 0.0
    %139 = vmatpush1.msra.mxu0 0.0
    %140 = vmatprep.subr.mxu0 0.0
    %141 = vmatpush1.msra.mxu0 0.0
    %142 = vmatprep.subr.mxu0 0.0
    %143 = vmatpush1.msra.mxu0 0.0
    %144 = vmatprep.subr.mxu0 0.0
    %145 = vmatpush1.msra.mxu0 0.0
    %146 = vmatprep.subr.mxu0 0.0
    %147 = vmatpush1.msra.mxu0 0.0
    %148 = vmatprep.subr.mxu0 0.0
    %149 = vmatpush1.msra.mxu0 0.0
    %150 = vmatprep.subr.mxu0 0.0
    %151 = vmatpush1.msra.mxu0 0.0
    %152 = vmatprep.subr.mxu0 0.0
    %153 = vmatpush1.msra.mxu0 0.0
    %154 = vmatprep.subr.mxu0 0.0
    %155 = vmatpush1.msra.mxu0 0.0
    %156 = vmatprep.subr.mxu0 0.0
    %157 = vmatpush1.msra.mxu0 0.0
    %158 = vmatprep.subr.mxu0 0.0
    %159 = vmatpush1.msra.mxu0 0.0
    %160 = vmatprep.subr.mxu0 0.0
    %161 = vmatpush1.msra.mxu0 0.0
    %162 = vmatprep.subr.mxu0 0.0
    %163 = vmatpush1.msra.mxu0 0.0
    %164 = vmatprep.subr.mxu0 0.0
    %165 = vmatpush1.msra.mxu0 0.0
    %166 = vmatprep.subr.mxu0 0.0
    %167 = vmatpush1.msra.mxu0 0.0
    %168 = vmatprep.subr.mxu0 0.0
    %169 = vmatpush1.msra.mxu0 0.0
    %170 = vmatprep.subr.mxu0 0.0
    %171 = vmatpush1.msra.mxu0 0.0
    %172 = vmatprep.subr.mxu0 0.0
    %173 = vmatpush1.msra.mxu0 0.0
    %174 = vmatprep.subr.mxu0 0.0
    %175 = vmatpush1.msra.mxu0 0.0
    %176 = vmatprep.mubr.f32.mxu0 0.0
    %177 = vmatmul.mubr.f32.gmra.mrb[0].mxu0 %v89
    %v178 = vpop.f32.mrb[0].mxu0
    %v179 = vadd.f32 %v85, %v178
    %v180 = vpop.f32.mrb[0].mxu0
    %181 = vmatprep.mubr.f32.mxu0 0.0
    %182 = vmatmul.mubr.f32.gmra.mrb[0].mxu0 %v92
    %v183 = vpop.f32.mrb[0].mxu0
    %v184 = vadd.f32 %v85, %v183
    %v185 = vpop.f32.mrb[0].mxu0
    %186 = vmatprep.mubr.f32.mxu0 0.0
    %187 = vmatmul.mubr.f32.gmra.mrb[0].mxu0 %v95
    %v188 = vpop.f32.mrb[0].mxu0
    %v189 = vadd.f32 %v85, %v188
    %v190 = vpop.f32.mrb[0].mxu0
    %191 = vmatprep.mubr.f32.mxu0 0.0
    %192 = vmatmul.mubr.f32.gmra.mrb[0].mxu0 %v98
    %v193 = vpop.f32.mrb[0].mxu0
    %v194 = vadd.f32 %v85, %v193
    %v195 = vpop.f32.mrb[0].mxu0
    %196 = vmatprep.mubr.f32.mxu0 0.0
    %197 = vmatmul.mubr.f32.gmra.mrb[0].mxu0 %v101
    %v198 = vpop.f32.mrb[0].mxu0
    %v199 = vadd.f32 %v85, %v198
    %v200 = vpop.f32.mrb[0].mxu0
    %201 = vmatprep.mubr.f32.mxu0 0.0
    %202 = vmatmul.mubr.f32.gmra.mrb[0].mxu0 %v104
    %v203 = vpop.f32.mrb[0].mxu0
    %v204 = vadd.f32 %v85, %v203
    %v205 = vpop.f32.mrb[0].mxu0
    %206 = vmatprep.mubr.f32.mxu0 0.0
    %207 = vmatmul.mubr.f32.gmra.mrb[0].mxu0 %v107
    %v208 = vpop.f32.mrb[0].mxu0
    %v209 = vadd.f32 %v85, %v208
    %v210 = vpop.f32.mrb[0].mxu0
    %211 = vmatprep.mubr.f32.mxu0 0.0
    %212 = vmatmul.mubr.f32.gmra.mrb[0].mxu0 %v110
    %v213 = vpop.f32.mrb[0].mxu0
    %v214 = vadd.f32 %v85, %v213
    %v215 = vpop.f32.mrb[0].mxu0
    %216 = vdwg.mxu0
    %217 = vst [vmem:[#allocation5] sm:$0xff] %v179
    %218 = vst [vmem:[#allocation5 + $0x8] sm:$0xff] %v184
    %219 = vst [vmem:[#allocation5 + $0x10] sm:$0xff] %v189
    %220 = vst [vmem:[#allocation5 + $0x18] sm:$0xff] %v194
    %221 = vst [vmem:[#allocation5 + $0x20] sm:$0xff] %v199
    %222 = vst [vmem:[#allocation5 + $0x28] sm:$0xff] %v204
    %223 = vst [vmem:[#allocation5 + $0x30] sm:$0xff] %v209
    %224 = vst [vmem:[#allocation5 + $0x38] sm:$0xff] %v214
    %v225 = vld [vmem:[%s2] sm:$0xff]
    %v226 = vld [vmem:[%s2 + $0x8] sm:$0xff]
    %v227 = vld [vmem:[%s2 + $0x10] sm:$0xff]
    %v228 = vld [vmem:[%s2 + $0x18] sm:$0xff]
    %v229 = vld [vmem:[#allocation2] sm:$0xff]
    %v230 = vld [vmem:[#allocation3] sm:$0xff]
    %v231 = vld [vmem:[#allocation5] sm:$0xff]
    %vm232 = vcmask 261120
    %v234 = vsel %vm232, %v229, 0
    %236 = vmatprep.subr.mxu0 0.0
    %237 = vmatpush1.msra.mxu0 %v225
    %238 = vmatprep.subr.mxu0 0.0
    %239 = vmatpush1.msra.mxu0 %v226
    %240 = vmatprep.subr.mxu0 0.0
    %241 = vmatpush1.msra.mxu0 %v227
    %242 = vmatprep.subr.mxu0 0.0
    %243 = vmatpush1.msra.mxu0 %v228
    %244 = vmatprep.subr.mxu0 0.0
    %245 = vmatpush1.msra.mxu0 0.0
    %246 = vmatprep.subr.mxu0 0.0
    %247 = vmatpush1.msra.mxu0 0.0
    %248 = vmatprep.subr.mxu0 0.0
    %249 = vmatpush1.msra.mxu0 0.0
    %250 = vmatprep.subr.mxu0 0.0
    %251 = vmatpush1.msra.mxu0 0.0
    %252 = vmatprep.subr.mxu0 0.0
    %253 = vmatpush1.msra.mxu0 0.0
    %254 = vmatprep.subr.mxu0 0.0
    %255 = vmatpush1.msra.mxu0 0.0
    %256 = vmatprep.subr.mxu0 0.0
    %257 = vmatpush1.msra.mxu0 0.0
    %258 = vmatprep.subr.mxu0 0.0
    %259 = vmatpush1.msra.mxu0 0.0
    %260 = vmatprep.subr.mxu0 0.0
    %261 = vmatpush1.msra.mxu0 0.0
    %262 = vmatprep.subr.mxu0 0.0
    %263 = vmatpush1.msra.mxu0 0.0
    %264 = vmatprep.subr.mxu0 0.0
    %265 = vmatpush1.msra.mxu0 0.0
    %266 = vmatprep.subr.mxu0 0.0
    %267 = vmatpush1.msra.mxu0 0.0
    %268 = vmatprep.subr.mxu0 0.0
    %269 = vmatpush1.msra.mxu0 0.0
    %270 = vmatprep.subr.mxu0 0.0
    %271 = vmatpush1.msra.mxu0 0.0
    %272 = vmatprep.subr.mxu0 0.0
    %273 = vmatpush1.msra.mxu0 0.0
    %274 = vmatprep.subr.mxu0 0.0
    %275 = vmatpush1.msra.mxu0 0.0
    %276 = vmatprep.subr.mxu0 0.0
    %277 = vmatpush1.msra.mxu0 0.0
    %278 = vmatprep.subr.mxu0 0.0
    %279 = vmatpush1.msra.mxu0 0.0
    %280 = vmatprep.subr.mxu0 0.0
    %281 = vmatpush1.msra.mxu0 0.0
    %282 = vmatprep.subr.mxu0 0.0
    %283 = vmatpush1.msra.mxu0 0.0
    %284 = vmatprep.subr.mxu0 0.0
    %285 = vmatpush1.msra.mxu0 0.0
    %286 = vmatprep.subr.mxu0 0.0
    %287 = vmatpush1.msra.mxu0 0.0
    %288 = vmatprep.subr.mxu0 0.0
    %289 = vmatpush1.msra.mxu0 0.0
    %290 = vmatprep.subr.mxu0 0.0
    %291 = vmatpush1.msra.mxu0 0.0
    %292 = vmatprep.subr.mxu0 0.0
    %293 = vmatpush1.msra.mxu0 0.0
    %294 = vmatprep.subr.mxu0 0.0
    %295 = vmatpush1.msra.mxu0 0.0
    %296 = vmatprep.subr.mxu0 0.0
    %297 = vmatpush1.msra.mxu0 0.0
    %298 = vmatprep.subr.mxu0 0.0
    %299 = vmatpush1.msra.mxu0 0.0
    %300 = vmatprep.mubr.f32.mxu0 0.0
    %301 = vmatmul.mubr.f32.gmra.mrb[0].mxu0 %v234
    %v302 = vpop.f32.mrb[0].mxu0
    %v303 = vadd.f32 0.0, %v302
    %v304 = vpop.f32.mrb[0].mxu0
    %305 = vdwg.mxu0
    %v306 = vadd.f32 %v231, %v303
    %v307 = vxor.u32 %v306, 2147483648
    %v308 = vmul.f32 %v307, 1.442695
    %v309 = vpow.pop %v308
    %v310 = vadd.f32 %v309, 1.0
    %v311 = vrcp.pop %v310
    %v312 = vmul.f32 1.0, %v311
    %v313 = vtanh.pop %v306
    %315 = vrot.lane.b32.xlu0 %v230, 32
    %v316 = vpop.permute.xlu0 %315
    %v318 = vmul.f32 %v312, %v316
    %320 = vrot.lane.b32.xlu0 %v313, 32
    %v321 = vpop.permute.xlu0 %320
    %v323 = vmul.f32 %v312, %v321
    %325 = vrot.lane.b32.xlu0 %v323, 32
    %v326 = vpop.permute.xlu0 %325
    %v328 = vadd.f32 %v318, %v326
    %v329 = vtanh.pop %v328
    %331 = vrot.lane.b32.xlu0 %v329, 32
    %v332 = vpop.permute.xlu0 %331
    %v334 = vmul.f32 %v312, %v332
    %336 = vrot.lane.b32.xlu0 %v334, 64
    %v337 = vpop.permute.xlu0 %336
    %339 = vst.msk [vmem:[#allocation4] sm:$0xff] %vm232, %v337
    %v340 = vld [vmem:[#allocation5 + $0x8] sm:$0xff]
    %v341 = vsel %vm232, %v337, 0
    %343 = vmatprep.subr.mxu0 0.0
    %344 = vmatpush1.msra.mxu0 %v225
    %345 = vmatprep.subr.mxu0 0.0
    %346 = vmatpush1.msra.mxu0 %v226
    %347 = vmatprep.subr.mxu0 0.0
    %348 = vmatpush1.msra.mxu0 %v227
    %349 = vmatprep.subr.mxu0 0.0
    %350 = vmatpush1.msra.mxu0 %v228
    %351 = vmatprep.subr.mxu0 0.0
    %352 = vmatpush1.msra.mxu0 0.0
    %353 = vmatprep.subr.mxu0 0.0
    %354 = vmatpush1.msra.mxu0 0.0
    %355 = vmatprep.subr.mxu0 0.0
    %356 = vmatpush1.msra.mxu0 0.0
    %357 = vmatprep.subr.mxu0 0.0
    %358 = vmatpush1.msra.mxu0 0.0
    %359 = vmatprep.subr.mxu0 0.0
    %360 = vmatpush1.msra.mxu0 0.0
    %361 = vmatprep.subr.mxu0 0.0
    %362 = vmatpush1.msra.mxu0 0.0
    %363 = vmatprep.subr.mxu0 0.0
    %364 = vmatpush1.msra.mxu0 0.0
    %365 = vmatprep.subr.mxu0 0.0
    %366 = vmatpush1.msra.mxu0 0.0
    %367 = vmatprep.subr.mxu0 0.0
    %368 = vmatpush1.msra.mxu0 0.0
    %369 = vmatprep.subr.mxu0 0.0
    %370 = vmatpush1.msra.mxu0 0.0
    %371 = vmatprep.subr.mxu0 0.0
    %372 = vmatpush1.msra.mxu0 0.0
    %373 = vmatprep.subr.mxu0 0.0
    %374 = vmatpush1.msra.mxu0 0.0
    %375 = vmatprep.subr.mxu0 0.0
    %376 = vmatpush1.msra.mxu0 0.0
    %377 = vmatprep.subr.mxu0 0.0
    %378 = vmatpush1.msra.mxu0 0.0
    %379 = vmatprep.subr.mxu0 0.0
    %380 = vmatpush1.msra.mxu0 0.0
    %381 = vmatprep.subr.mxu0 0.0
    %382 = vmatpush1.msra.mxu0 0.0
    %383 = vmatprep.subr.mxu0 0.0
    %384 = vmatpush1.msra.mxu0 0.0
    %385 = vmatprep.subr.mxu0 0.0
    %386 = vmatpush1.msra.mxu0 0.0
    %387 = vmatprep.subr.mxu0 0.0
    %388 = vmatpush1.msra.mxu0 0.0
    %389 = vmatprep.subr.mxu0 0.0
    %390 = vmatpush1.msra.mxu0 0.0
    %391 = vmatprep.subr.mxu0 0.0
    %392 = vmatpush1.msra.mxu0 0.0
    %393 = vmatprep.subr.mxu0 0.0
    %394 = vmatpush1.msra.mxu0 0.0
    %395 = vmatprep.subr.mxu0 0.0
    %396 = vmatpush1.msra.mxu0 0.0
    %397 = vmatprep.subr.mxu0 0.0
    %398 = vmatpush1.msra.mxu0 0.0
    %399 = vmatprep.subr.mxu0 0.0
    %400 = vmatpush1.msra.mxu0 0.0
    %401 = vmatprep.subr.mxu0 0.0
    %402 = vmatpush1.msra.mxu0 0.0
    %403 = vmatprep.subr.mxu0 0.0
    %404 = vmatpush1.msra.mxu0 0.0
    %405 = vmatprep.subr.mxu0 0.0
    %406 = vmatpush1.msra.mxu0 0.0
    %407 = vmatprep.mubr.f32.mxu0 0.0
    %408 = vmatmul.mubr.f32.gmra.mrb[0].mxu0 %v341
    %v409 = vpop.f32.mrb[0].mxu0
    %v410 = vadd.f32 0.0, %v409
    %v411 = vpop.f32.mrb[0].mxu0
    %412 = vdwg.mxu0
    %v413 = vadd.f32 %v340, %v410
    %v414 = vxor.u32 %v413, 2147483648
    %v415 = vmul.f32 %v414, 1.442695
    %v416 = vpow.pop %v415
    %v417 = vadd.f32 %v416, 1.0
    %v418 = vrcp.pop %v417
    %v419 = vmul.f32 1.0, %v418
    %v420 = vtanh.pop %v413
    %v421 = vmul.f32 %v419, %v328
    %423 = vrot.lane.b32.xlu0 %v420, 32
    %v424 = vpop.permute.xlu0 %423
    %v426 = vmul.f32 %v419, %v424
    %428 = vrot.lane.b32.xlu0 %v426, 32
    %v429 = vpop.permute.xlu0 %428
    %v431 = vadd.f32 %v421, %v429
    %v432 = vtanh.pop %v431
    %434 = vrot.lane.b32.xlu0 %v432, 32
    %v435 = vpop.permute.xlu0 %434
    %v437 = vmul.f32 %v419, %v435
    %439 = vrot.lane.b32.xlu0 %v437, 64
    %v440 = vpop.permute.xlu0 %439
    %442 = vst.msk [vmem:[#allocation4 + $0x8] sm:$0xff] %vm232, %v440
    %v443 = vld [vmem:[#allocation5 + $0x10] sm:$0xff]
    %v444 = vsel %vm232, %v440, 0
    %446 = vmatprep.subr.mxu0 0.0
    %447 = vmatpush1.msra.mxu0 %v225
    %448 = vmatprep.subr.mxu0 0.0
    %449 = vmatpush1.msra.mxu0 %v226
    %450 = vmatprep.subr.mxu0 0.0
    %451 = vmatpush1.msra.mxu0 %v227
    %452 = vmatprep.subr.mxu0 0.0
    %453 = vmatpush1.msra.mxu0 %v228
    %454 = vmatprep.subr.mxu0 0.0
    %455 = vmatpush1.msra.mxu0 0.0
    %456 = vmatprep.subr.mxu0 0.0
    %457 = vmatpush1.msra.mxu0 0.0
    %458 = vmatprep.subr.mxu0 0.0
    %459 = vmatpush1.msra.mxu0 0.0
    %460 = vmatprep.subr.mxu0 0.0
    %461 = vmatpush1.msra.mxu0 0.0
    %462 = vmatprep.subr.mxu0 0.0
    %463 = vmatpush1.msra.mxu0 0.0
    %464 = vmatprep.subr.mxu0 0.0
    %465 = vmatpush1.msra.mxu0 0.0
    %466 = vmatprep.subr.mxu0 0.0
    %467 = vmatpush1.msra.mxu0 0.0
    %468 = vmatprep.subr.mxu0 0.0
    %469 = vmatpush1.msra.mxu0 0.0
    %470 = vmatprep.subr.mxu0 0.0
    %471 = vmatpush1.msra.mxu0 0.0
    %472 = vmatprep.subr.mxu0 0.0
    %473 = vmatpush1.msra.mxu0 0.0
    %474 = vmatprep.subr.mxu0 0.0
    %475 = vmatpush1.msra.mxu0 0.0
    %476 = vmatprep.subr.mxu0 0.0
    %477 = vmatpush1.msra.mxu0 0.0
    %478 = vmatprep.subr.mxu0 0.0
    %479 = vmatpush1.msra.mxu0 0.0
    %480 = vmatprep.subr.mxu0 0.0
    %481 = vmatpush1.msra.mxu0 0.0
    %482 = vmatprep.subr.mxu0 0.0
    %483 = vmatpush1.msra.mxu0 0.0
    %484 = vmatprep.subr.mxu0 0.0
    %485 = vmatpush1.msra.mxu0 0.0
    %486 = vmatprep.subr.mxu0 0.0
    %487 = vmatpush1.msra.mxu0 0.0
    %488 = vmatprep.subr.mxu0 0.0
    %489 = vmatpush1.msra.mxu0 0.0
    %490 = vmatprep.subr.mxu0 0.0
    %491 = vmatpush1.msra.mxu0 0.0
    %492 = vmatprep.subr.mxu0 0.0
    %493 = vmatpush1.msra.mxu0 0.0
    %494 = vmatprep.subr.mxu0 0.0
    %495 = vmatpush1.msra.mxu0 0.0
    %496 = vmatprep.subr.mxu0 0.0
    %497 = vmatpush1.msra.mxu0 0.0
    %498 = vmatprep.subr.mxu0 0.0
    %499 = vmatpush1.msra.mxu0 0.0
    %500 = vmatprep.subr.mxu0 0.0
    %501 = vmatpush1.msra.mxu0 0.0
    %502 = vmatprep.subr.mxu0 0.0
    %503 = vmatpush1.msra.mxu0 0.0
    %504 = vmatprep.subr.mxu0 0.0
    %505 = vmatpush1.msra.mxu0 0.0
    %506 = vmatprep.subr.mxu0 0.0
    %507 = vmatpush1.msra.mxu0 0.0
    %508 = vmatprep.subr.mxu0 0.0
    %509 = vmatpush1.msra.mxu0 0.0
    %510 = vmatprep.mubr.f32.mxu0 0.0
    %511 = vmatmul.mubr.f32.gmra.mrb[0].mxu0 %v444
    %v512 = vpop.f32.mrb[0].mxu0
    %v513 = vadd.f32 0.0, %v512
    %v514 = vpop.f32.mrb[0].mxu0
    %515 = vdwg.mxu0
    %v516 = vadd.f32 %v443, %v513
    %v517 = vxor.u32 %v516, 2147483648
    %v518 = vmul.f32 %v517, 1.442695
    %v519 = vpow.pop %v518
    %v520 = vadd.f32 %v519, 1.0
    %v521 = vrcp.pop %v520
    %v522 = vmul.f32 1.0, %v521
    %v523 = vtanh.pop %v516
    %v524 = vmul.f32 %v522, %v431
    %526 = vrot.lane.b32.xlu0 %v523, 32
    %v527 = vpop.permute.xlu0 %526
    %v529 = vmul.f32 %v522, %v527
    %531 = vrot.lane.b32.xlu0 %v529, 32
    %v532 = vpop.permute.xlu0 %531
    %v534 = vadd.f32 %v524, %v532
    %v535 = vtanh.pop %v534
    %537 = vrot.lane.b32.xlu0 %v535, 32
    %v538 = vpop.permute.xlu0 %537
    %v540 = vmul.f32 %v522, %v538
    %542 = vrot.lane.b32.xlu0 %v540, 64
    %v543 = vpop.permute.xlu0 %542
    %545 = vst.msk [vmem:[#allocation4 + $0x10] sm:$0xff] %vm232, %v543
    %v546 = vld [vmem:[#allocation5 + $0x18] sm:$0xff]
    %v547 = vsel %vm232, %v543, 0
    %549 = vmatprep.subr.mxu0 0.0
    %550 = vmatpush1.msra.mxu0 %v225
    %551 = vmatprep.subr.mxu0 0.0
    %552 = vmatpush1.msra.mxu0 %v226
    %553 = vmatprep.subr.mxu0 0.0
    %554 = vmatpush1.msra.mxu0 %v227
    %555 = vmatprep.subr.mxu0 0.0
    %556 = vmatpush1.msra.mxu0 %v228
    %557 = vmatprep.subr.mxu0 0.0
    %558 = vmatpush1.msra.mxu0 0.0
    %559 = vmatprep.subr.mxu0 0.0
    %560 = vmatpush1.msra.mxu0 0.0
    %561 = vmatprep.subr.mxu0 0.0
    %562 = vmatpush1.msra.mxu0 0.0
    %563 = vmatprep.subr.mxu0 0.0
    %564 = vmatpush1.msra.mxu0 0.0
    %565 = vmatprep.subr.mxu0 0.0
    %566 = vmatpush1.msra.mxu0 0.0
    %567 = vmatprep.subr.mxu0 0.0
    %568 = vmatpush1.msra.mxu0 0.0
    %569 = vmatprep.subr.mxu0 0.0
    %570 = vmatpush1.msra.mxu0 0.0
    %571 = vmatprep.subr.mxu0 0.0
    %572 = vmatpush1.msra.mxu0 0.0
    %573 = vmatprep.subr.mxu0 0.0
    %574 = vmatpush1.msra.mxu0 0.0
    %575 = vmatprep.subr.mxu0 0.0
    %576 = vmatpush1.msra.mxu0 0.0
    %577 = vmatprep.subr.mxu0 0.0
    %578 = vmatpush1.msra.mxu0 0.0
    %579 = vmatprep.subr.mxu0 0.0
    %580 = vmatpush1.msra.mxu0 0.0
    %581 = vmatprep.subr.mxu0 0.0
    %582 = vmatpush1.msra.mxu0 0.0
    %583 = vmatprep.subr.mxu0 0.0
    %584 = vmatpush1.msra.mxu0 0.0
    %585 = vmatprep.subr.mxu0 0.0
    %586 = vmatpush1.msra.mxu0 0.0
    %587 = vmatprep.subr.mxu0 0.0
    %588 = vmatpush1.msra.mxu0 0.0
    %589 = vmatprep.subr.mxu0 0.0
    %590 = vmatpush1.msra.mxu0 0.0
    %591 = vmatprep.subr.mxu0 0.0
    %592 = vmatpush1.msra.mxu0 0.0
    %593 = vmatprep.subr.mxu0 0.0
    %594 = vmatpush1.msra.mxu0 0.0
    %595 = vmatprep.subr.mxu0 0.0
    %596 = vmatpush1.msra.mxu0 0.0
    %597 = vmatprep.subr.mxu0 0.0
    %598 = vmatpush1.msra.mxu0 0.0
    %599 = vmatprep.subr.mxu0 0.0
    %600 = vmatpush1.msra.mxu0 0.0
    %601 = vmatprep.subr.mxu0 0.0
    %602 = vmatpush1.msra.mxu0 0.0
    %603 = vmatprep.subr.mxu0 0.0
    %604 = vmatpush1.msra.mxu0 0.0
    %605 = vmatprep.subr.mxu0 0.0
    %606 = vmatpush1.msra.mxu0 0.0
    %607 = vmatprep.subr.mxu0 0.0
    %608 = vmatpush1.msra.mxu0 0.0
    %609 = vmatprep.subr.mxu0 0.0
    %610 = vmatpush1.msra.mxu0 0.0
    %611 = vmatprep.subr.mxu0 0.0
    %612 = vmatpush1.msra.mxu0 0.0
    %613 = vmatprep.mubr.f32.mxu0 0.0
    %614 = vmatmul.mubr.f32.gmra.mrb[0].mxu0 %v547
    %v615 = vpop.f32.mrb[0].mxu0
    %v616 = vadd.f32 0.0, %v615
    %v617 = vpop.f32.mrb[0].mxu0
    %618 = vdwg.mxu0
    %v619 = vadd.f32 %v546, %v616
    %v620 = vxor.u32 %v619, 2147483648
    %v621 = vmul.f32 %v620, 1.442695
    %v622 = vpow.pop %v621
    %v623 = vadd.f32 %v622, 1.0
    %v624 = vrcp.pop %v623
    %v625 = vmul.f32 1.0, %v624
    %v626 = vtanh.pop %v619
    %v627 = vmul.f32 %v625, %v534
    %629 = vrot.lane.b32.xlu0 %v626, 32
    %v630 = vpop.permute.xlu0 %629
    %v632 = vmul.f32 %v625, %v630
    %634 = vrot.lane.b32.xlu0 %v632, 32
    %v635 = vpop.permute.xlu0 %634
    %v637 = vadd.f32 %v627, %v635
    %v638 = vtanh.pop %v637
    %640 = vrot.lane.b32.xlu0 %v638, 32
    %v641 = vpop.permute.xlu0 %640
    %v643 = vmul.f32 %v625, %v641
    %645 = vrot.lane.b32.xlu0 %v643, 64
    %v646 = vpop.permute.xlu0 %645
    %648 = vst.msk [vmem:[#allocation4 + $0x18] sm:$0xff] %vm232, %v646
    %v649 = vld [vmem:[#allocation5 + $0x20] sm:$0xff]
    %v650 = vsel %vm232, %v646, 0
    %652 = vmatprep.subr.mxu0 0.0
    %653 = vmatpush1.msra.mxu0 %v225
    %654 = vmatprep.subr.mxu0 0.0
    %655 = vmatpush1.msra.mxu0 %v226
    %656 = vmatprep.subr.mxu0 0.0
    %657 = vmatpush1.msra.mxu0 %v227
    %658 = vmatprep.subr.mxu0 0.0
    %659 = vmatpush1.msra.mxu0 %v228
    %660 = vmatprep.subr.mxu0 0.0
    %661 = vmatpush1.msra.mxu0 0.0
    %662 = vmatprep.subr.mxu0 0.0
    %663 = vmatpush1.msra.mxu0 0.0
    %664 = vmatprep.subr.mxu0 0.0
    %665 = vmatpush1.msra.mxu0 0.0
    %666 = vmatprep.subr.mxu0 0.0
    %667 = vmatpush1.msra.mxu0 0.0
    %668 = vmatprep.subr.mxu0 0.0
    %669 = vmatpush1.msra.mxu0 0.0
    %670 = vmatprep.subr.mxu0 0.0
    %671 = vmatpush1.msra.mxu0 0.0
    %672 = vmatprep.subr.mxu0 0.0
    %673 = vmatpush1.msra.mxu0 0.0
    %674 = vmatprep.subr.mxu0 0.0
    %675 = vmatpush1.msra.mxu0 0.0
    %676 = vmatprep.subr.mxu0 0.0
    %677 = vmatpush1.msra.mxu0 0.0
    %678 = vmatprep.subr.mxu0 0.0
    %679 = vmatpush1.msra.mxu0 0.0
    %680 = vmatprep.subr.mxu0 0.0
    %681 = vmatpush1.msra.mxu0 0.0
    %682 = vmatprep.subr.mxu0 0.0
    %683 = vmatpush1.msra.mxu0 0.0
    %684 = vmatprep.subr.mxu0 0.0
    %685 = vmatpush1.msra.mxu0 0.0
    %686 = vmatprep.subr.mxu0 0.0
    %687 = vmatpush1.msra.mxu0 0.0
    %688 = vmatprep.subr.mxu0 0.0
    %689 = vmatpush1.msra.mxu0 0.0
    %690 = vmatprep.subr.mxu0 0.0
    %691 = vmatpush1.msra.mxu0 0.0
    %692 = vmatprep.subr.mxu0 0.0
    %693 = vmatpush1.msra.mxu0 0.0
    %694 = vmatprep.subr.mxu0 0.0
    %695 = vmatpush1.msra.mxu0 0.0
    %696 = vmatprep.subr.mxu0 0.0
    %697 = vmatpush1.msra.mxu0 0.0
    %698 = vmatprep.subr.mxu0 0.0
    %699 = vmatpush1.msra.mxu0 0.0
    %700 = vmatprep.subr.mxu0 0.0
    %701 = vmatpush1.msra.mxu0 0.0
    %702 = vmatprep.subr.mxu0 0.0
    %703 = vmatpush1.msra.mxu0 0.0
    %704 = vmatprep.subr.mxu0 0.0
    %705 = vmatpush1.msra.mxu0 0.0
    %706 = vmatprep.subr.mxu0 0.0
    %707 = vmatpush1.msra.mxu0 0.0
    %708 = vmatprep.subr.mxu0 0.0
    %709 = vmatpush1.msra.mxu0 0.0
    %710 = vmatprep.subr.mxu0 0.0
    %711 = vmatpush1.msra.mxu0 0.0
    %712 = vmatprep.subr.mxu0 0.0
    %713 = vmatpush1.msra.mxu0 0.0
    %714 = vmatprep.subr.mxu0 0.0
    %715 = vmatpush1.msra.mxu0 0.0
    %716 = vmatprep.mubr.f32.mxu0 0.0
    %717 = vmatmul.mubr.f32.gmra.mrb[0].mxu0 %v650
    %v718 = vpop.f32.mrb[0].mxu0
    %v719 = vadd.f32 0.0, %v718
    %v720 = vpop.f32.mrb[0].mxu0
    %721 = vdwg.mxu0
    %v722 = vadd.f32 %v649, %v719
    %v723 = vxor.u32 %v722, 2147483648
    %v724 = vmul.f32 %v723, 1.442695
    %v725 = vpow.pop %v724
    %v726 = vadd.f32 %v725, 1.0
    %v727 = vrcp.pop %v726
    %v728 = vmul.f32 1.0, %v727
    %v729 = vtanh.pop %v722
    %v730 = vmul.f32 %v728, %v637
    %732 = vrot.lane.b32.xlu0 %v729, 32
    %v733 = vpop.permute.xlu0 %732
    %v735 = vmul.f32 %v728, %v733
    %737 = vrot.lane.b32.xlu0 %v735, 32
    %v738 = vpop.permute.xlu0 %737
    %v740 = vadd.f32 %v730, %v738
    %v741 = vtanh.pop %v740
    %743 = vrot.lane.b32.xlu0 %v741, 32
    %v744 = vpop.permute.xlu0 %743
    %v746 = vmul.f32 %v728, %v744
    %748 = vrot.lane.b32.xlu0 %v746, 64
    %v749 = vpop.permute.xlu0 %748
    %751 = vst.msk [vmem:[#allocation4 + $0x20] sm:$0xff] %vm232, %v749
    %v752 = vld [vmem:[#allocation5 + $0x28] sm:$0xff]
    %v753 = vsel %vm232, %v749, 0
    %755 = vmatprep.subr.mxu0 0.0
    %756 = vmatpush1.msra.mxu0 %v225
    %757 = vmatprep.subr.mxu0 0.0
    %758 = vmatpush1.msra.mxu0 %v226
    %759 = vmatprep.subr.mxu0 0.0
    %760 = vmatpush1.msra.mxu0 %v227
    %761 = vmatprep.subr.mxu0 0.0
    %762 = vmatpush1.msra.mxu0 %v228
    %763 = vmatprep.subr.mxu0 0.0
    %764 = vmatpush1.msra.mxu0 0.0
    %765 = vmatprep.subr.mxu0 0.0
    %766 = vmatpush1.msra.mxu0 0.0
    %767 = vmatprep.subr.mxu0 0.0
    %768 = vmatpush1.msra.mxu0 0.0
    %769 = vmatprep.subr.mxu0 0.0
    %770 = vmatpush1.msra.mxu0 0.0
    %771 = vmatprep.subr.mxu0 0.0
    %772 = vmatpush1.msra.mxu0 0.0
    %773 = vmatprep.subr.mxu0 0.0
    %774 = vmatpush1.msra.mxu0 0.0
    %775 = vmatprep.subr.mxu0 0.0
    %776 = vmatpush1.msra.mxu0 0.0
    %777 = vmatprep.subr.mxu0 0.0
    %778 = vmatpush1.msra.mxu0 0.0
    %779 = vmatprep.subr.mxu0 0.0
    %780 = vmatpush1.msra.mxu0 0.0
    %781 = vmatprep.subr.mxu0 0.0
    %782 = vmatpush1.msra.mxu0 0.0
    %783 = vmatprep.subr.mxu0 0.0
    %784 = vmatpush1.msra.mxu0 0.0
    %785 = vmatprep.subr.mxu0 0.0
    %786 = vmatpush1.msra.mxu0 0.0
    %787 = vmatprep.subr.mxu0 0.0
    %788 = vmatpush1.msra.mxu0 0.0
    %789 = vmatprep.subr.mxu0 0.0
    %790 = vmatpush1.msra.mxu0 0.0
    %791 = vmatprep.subr.mxu0 0.0
    %792 = vmatpush1.msra.mxu0 0.0
    %793 = vmatprep.subr.mxu0 0.0
    %794 = vmatpush1.msra.mxu0 0.0
    %795 = vmatprep.subr.mxu0 0.0
    %796 = vmatpush1.msra.mxu0 0.0
    %797 = vmatprep.subr.mxu0 0.0
    %798 = vmatpush1.msra.mxu0 0.0
    %799 = vmatprep.subr.mxu0 0.0
    %800 = vmatpush1.msra.mxu0 0.0
    %801 = vmatprep.subr.mxu0 0.0
    %802 = vmatpush1.msra.mxu0 0.0
    %803 = vmatprep.subr.mxu0 0.0
    %804 = vmatpush1.msra.mxu0 0.0
    %805 = vmatprep.subr.mxu0 0.0
    %806 = vmatpush1.msra.mxu0 0.0
    %807 = vmatprep.subr.mxu0 0.0
    %808 = vmatpush1.msra.mxu0 0.0
    %809 = vmatprep.subr.mxu0 0.0
    %810 = vmatpush1.msra.mxu0 0.0
    %811 = vmatprep.subr.mxu0 0.0
    %812 = vmatpush1.msra.mxu0 0.0
    %813 = vmatprep.subr.mxu0 0.0
    %814 = vmatpush1.msra.mxu0 0.0
    %815 = vmatprep.subr.mxu0 0.0
    %816 = vmatpush1.msra.mxu0 0.0
    %817 = vmatprep.subr.mxu0 0.0
    %818 = vmatpush1.msra.mxu0 0.0
    %819 = vmatprep.mubr.f32.mxu0 0.0
    %820 = vmatmul.mubr.f32.gmra.mrb[0].mxu0 %v753
    %v821 = vpop.f32.mrb[0].mxu0
    %v822 = vadd.f32 0.0, %v821
    %v823 = vpop.f32.mrb[0].mxu0
    %824 = vdwg.mxu0
    %v825 = vadd.f32 %v752, %v822
    %v826 = vxor.u32 %v825, 2147483648
    %v827 = vmul.f32 %v826, 1.442695
    %v828 = vpow.pop %v827
    %v829 = vadd.f32 %v828, 1.0
    %v830 = vrcp.pop %v829
    %v831 = vmul.f32 1.0, %v830
    %v832 = vtanh.pop %v825
    %v833 = vmul.f32 %v831, %v740
    %835 = vrot.lane.b32.xlu0 %v832, 32
    %v836 = vpop.permute.xlu0 %835
    %v838 = vmul.f32 %v831, %v836
    %840 = vrot.lane.b32.xlu0 %v838, 32
    %v841 = vpop.permute.xlu0 %840
    %v843 = vadd.f32 %v833, %v841
    %v844 = vtanh.pop %v843
    %846 = vrot.lane.b32.xlu0 %v844, 32
    %v847 = vpop.permute.xlu0 %846
    %v849 = vmul.f32 %v831, %v847
    %851 = vrot.lane.b32.xlu0 %v849, 64
    %v852 = vpop.permute.xlu0 %851
    %854 = vst.msk [vmem:[#allocation4 + $0x28] sm:$0xff] %vm232, %v852
    %v855 = vld [vmem:[#allocation5 + $0x30] sm:$0xff]
    %v856 = vsel %vm232, %v852, 0
    %858 = vmatprep.subr.mxu0 0.0
    %859 = vmatpush1.msra.mxu0 %v225
    %860 = vmatprep.subr.mxu0 0.0
    %861 = vmatpush1.msra.mxu0 %v226
    %862 = vmatprep.subr.mxu0 0.0
    %863 = vmatpush1.msra.mxu0 %v227
    %864 = vmatprep.subr.mxu0 0.0
    %865 = vmatpush1.msra.mxu0 %v228
    %866 = vmatprep.subr.mxu0 0.0
    %867 = vmatpush1.msra.mxu0 0.0
    %868 = vmatprep.subr.mxu0 0.0
    %869 = vmatpush1.msra.mxu0 0.0
    %870 = vmatprep.subr.mxu0 0.0
    %871 = vmatpush1.msra.mxu0 0.0
    %872 = vmatprep.subr.mxu0 0.0
    %873 = vmatpush1.msra.mxu0 0.0
    %874 = vmatprep.subr.mxu0 0.0
    %875 = vmatpush1.msra.mxu0 0.0
    %876 = vmatprep.subr.mxu0 0.0
    %877 = vmatpush1.msra.mxu0 0.0
    %878 = vmatprep.subr.mxu0 0.0
    %879 = vmatpush1.msra.mxu0 0.0
    %880 = vmatprep.subr.mxu0 0.0
    %881 = vmatpush1.msra.mxu0 0.0
    %882 = vmatprep.subr.mxu0 0.0
    %883 = vmatpush1.msra.mxu0 0.0
    %884 = vmatprep.subr.mxu0 0.0
    %885 = vmatpush1.msra.mxu0 0.0
    %886 = vmatprep.subr.mxu0 0.0
    %887 = vmatpush1.msra.mxu0 0.0
    %888 = vmatprep.subr.mxu0 0.0
    %889 = vmatpush1.msra.mxu0 0.0
    %890 = vmatprep.subr.mxu0 0.0
    %891 = vmatpush1.msra.mxu0 0.0
    %892 = vmatprep.subr.mxu0 0.0
    %893 = vmatpush1.msra.mxu0 0.0
    %894 = vmatprep.subr.mxu0 0.0
    %895 = vmatpush1.msra.mxu0 0.0
    %896 = vmatprep.subr.mxu0 0.0
    %897 = vmatpush1.msra.mxu0 0.0
    %898 = vmatprep.subr.mxu0 0.0
    %899 = vmatpush1.msra.mxu0 0.0
    %900 = vmatprep.subr.mxu0 0.0
    %901 = vmatpush1.msra.mxu0 0.0
    %902 = vmatprep.subr.mxu0 0.0
    %903 = vmatpush1.msra.mxu0 0.0
    %904 = vmatprep.subr.mxu0 0.0
    %905 = vmatpush1.msra.mxu0 0.0
    %906 = vmatprep.subr.mxu0 0.0
    %907 = vmatpush1.msra.mxu0 0.0
    %908 = vmatprep.subr.mxu0 0.0
    %909 = vmatpush1.msra.mxu0 0.0
    %910 = vmatprep.subr.mxu0 0.0
    %911 = vmatpush1.msra.mxu0 0.0
    %912 = vmatprep.subr.mxu0 0.0
    %913 = vmatpush1.msra.mxu0 0.0
    %914 = vmatprep.subr.mxu0 0.0
    %915 = vmatpush1.msra.mxu0 0.0
    %916 = vmatprep.subr.mxu0 0.0
    %917 = vmatpush1.msra.mxu0 0.0
    %918 = vmatprep.subr.mxu0 0.0
    %919 = vmatpush1.msra.mxu0 0.0
    %920 = vmatprep.subr.mxu0 0.0
    %921 = vmatpush1.msra.mxu0 0.0
    %922 = vmatprep.mubr.f32.mxu0 0.0
    %923 = vmatmul.mubr.f32.gmra.mrb[0].mxu0 %v856
    %v924 = vpop.f32.mrb[0].mxu0
    %v925 = vadd.f32 0.0, %v924
    %v926 = vpop.f32.mrb[0].mxu0
    %927 = vdwg.mxu0
    %v928 = vadd.f32 %v855, %v925
    %v929 = vxor.u32 %v928, 2147483648
    %v930 = vmul.f32 %v929, 1.442695
    %v931 = vpow.pop %v930
    %v932 = vadd.f32 %v931, 1.0
    %v933 = vrcp.pop %v932
    %v934 = vmul.f32 1.0, %v933
    %v935 = vtanh.pop %v928
    %v936 = vmul.f32 %v934, %v843
    %938 = vrot.lane.b32.xlu0 %v935, 32
    %v939 = vpop.permute.xlu0 %938
    %v941 = vmul.f32 %v934, %v939
    %943 = vrot.lane.b32.xlu0 %v941, 32
    %v944 = vpop.permute.xlu0 %943
    %v946 = vadd.f32 %v936, %v944
    %v947 = vtanh.pop %v946
    %949 = vrot.lane.b32.xlu0 %v947, 32
    %v950 = vpop.permute.xlu0 %949
    %v952 = vmul.f32 %v934, %v950
    %954 = vrot.lane.b32.xlu0 %v952, 64
    %v955 = vpop.permute.xlu0 %954
    %957 = vst.msk [vmem:[#allocation4 + $0x30] sm:$0xff] %vm232, %v955
    %v958 = vld [vmem:[#allocation5 + $0x38] sm:$0xff]
    %v959 = vsel %vm232, %v955, 0
    %961 = vmatprep.subr.mxu0 0.0
    %962 = vmatpush1.msra.mxu0 %v225
    %963 = vmatprep.subr.mxu0 0.0
    %964 = vmatpush1.msra.mxu0 %v226
    %965 = vmatprep.subr.mxu0 0.0
    %966 = vmatpush1.msra.mxu0 %v227
    %967 = vmatprep.subr.mxu0 0.0
    %968 = vmatpush1.msra.mxu0 %v228
    %969 = vmatprep.subr.mxu0 0.0
    %970 = vmatpush1.msra.mxu0 0.0
    %971 = vmatprep.subr.mxu0 0.0
    %972 = vmatpush1.msra.mxu0 0.0
    %973 = vmatprep.subr.mxu0 0.0
    %974 = vmatpush1.msra.mxu0 0.0
    %975 = vmatprep.subr.mxu0 0.0
    %976 = vmatpush1.msra.mxu0 0.0
    %977 = vmatprep.subr.mxu0 0.0
    %978 = vmatpush1.msra.mxu0 0.0
    %979 = vmatprep.subr.mxu0 0.0
    %980 = vmatpush1.msra.mxu0 0.0
    %981 = vmatprep.subr.mxu0 0.0
    %982 = vmatpush1.msra.mxu0 0.0
    %983 = vmatprep.subr.mxu0 0.0
    %984 = vmatpush1.msra.mxu0 0.0
    %985 = vmatprep.subr.mxu0 0.0
    %986 = vmatpush1.msra.mxu0 0.0
    %987 = vmatprep.subr.mxu0 0.0
    %988 = vmatpush1.msra.mxu0 0.0
    %989 = vmatprep.subr.mxu0 0.0
    %990 = vmatpush1.msra.mxu0 0.0
    %991 = vmatprep.subr.mxu0 0.0
    %992 = vmatpush1.msra.mxu0 0.0
    %993 = vmatprep.subr.mxu0 0.0
    %994 = vmatpush1.msra.mxu0 0.0
    %995 = vmatprep.subr.mxu0 0.0
    %996 = vmatpush1.msra.mxu0 0.0
    %997 = vmatprep.subr.mxu0 0.0
    %998 = vmatpush1.msra.mxu0 0.0
    %999 = vmatprep.subr.mxu0 0.0
    %1000 = vmatpush1.msra.mxu0 0.0
    %1001 = vmatprep.subr.mxu0 0.0
    %1002 = vmatpush1.msra.mxu0 0.0
    %1003 = vmatprep.subr.mxu0 0.0
    %1004 = vmatpush1.msra.mxu0 0.0
    %1005 = vmatprep.subr.mxu0 0.0
    %1006 = vmatpush1.msra.mxu0 0.0
    %1007 = vmatprep.subr.mxu0 0.0
    %1008 = vmatpush1.msra.mxu0 0.0
    %1009 = vmatprep.subr.mxu0 0.0
    %1010 = vmatpush1.msra.mxu0 0.0
    %1011 = vmatprep.subr.mxu0 0.0
    %1012 = vmatpush1.msra.mxu0 0.0
    %1013 = vmatprep.subr.mxu0 0.0
    %1014 = vmatpush1.msra.mxu0 0.0
    %1015 = vmatprep.subr.mxu0 0.0
    %1016 = vmatpush1.msra.mxu0 0.0
    %1017 = vmatprep.subr.mxu0 0.0
    %1018 = vmatpush1.msra.mxu0 0.0
    %1019 = vmatprep.subr.mxu0 0.0
    %1020 = vmatpush1.msra.mxu0 0.0
    %1021 = vmatprep.subr.mxu0 0.0
    %1022 = vmatpush1.msra.mxu0 0.0
    %1023 = vmatprep.subr.mxu0 0.0
    %1024 = vmatpush1.msra.mxu0 0.0
    %1025 = vmatprep.mubr.f32.mxu0 0.0
    %1026 = vmatmul.mubr.f32.gmra.mrb[0].mxu0 %v959
    %v1027 = vpop.f32.mrb[0].mxu0
    %v1028 = vadd.f32 0.0, %v1027
    %v1029 = vpop.f32.mrb[0].mxu0
    %1030 = vdwg.mxu0
    %v1031 = vadd.f32 %v958, %v1028
    %v1032 = vxor.u32 %v1031, 2147483648
    %v1033 = vmul.f32 %v1032, 1.442695
    %v1034 = vpow.pop %v1033
    %v1035 = vadd.f32 %v1034, 1.0
    %v1036 = vrcp.pop %v1035
    %v1037 = vmul.f32 1.0, %v1036
    %v1038 = vtanh.pop %v1031
    %v1039 = vmul.f32 %v1037, %v946
    %1041 = vrot.lane.b32.xlu0 %v1038, 32
    %v1042 = vpop.permute.xlu0 %1041
    %v1044 = vmul.f32 %v1037, %v1042
    %1046 = vrot.lane.b32.xlu0 %v1044, 32
    %v1047 = vpop.permute.xlu0 %1046
    %v1049 = vadd.f32 %v1039, %v1047
    %v1050 = vtanh.pop %v1049
    %1052 = vrot.lane.b32.xlu0 %v1050, 32
    %v1053 = vpop.permute.xlu0 %1052
    %v1055 = vmul.f32 %v1037, %v1053
    %1057 = vrot.lane.b32.xlu0 %v1055, 64
    %v1058 = vpop.permute.xlu0 %1057
    %1060 = vst.msk [vmem:[#allocation4 + $0x38] sm:$0xff] %vm232, %v1058
    %1061 = vst.msk [vmem:[#allocation2] sm:$0xff] %vm232, %v1058
    %1063 = vrot.lane.b32.xlu0 %v1049, 96
    %v1064 = vpop.permute.xlu0 %1063
    %1066 = vst.msk [vmem:[#allocation3] sm:$0xff] %vm232, %v1064
    %v1067 = vld [vmem:[#allocation4] sm:$0xff]
    %v1068 = vld [vmem:[#allocation4 + $0x8] sm:$0xff]
    %v1069 = vld [vmem:[#allocation4 + $0x10] sm:$0xff]
    %v1070 = vld [vmem:[#allocation4 + $0x18] sm:$0xff]
    %v1071 = vld [vmem:[#allocation4 + $0x20] sm:$0xff]
    %v1072 = vld [vmem:[#allocation4 + $0x28] sm:$0xff]
    %v1073 = vld [vmem:[#allocation4 + $0x30] sm:$0xff]
    %v1074 = vld [vmem:[#allocation4 + $0x38] sm:$0xff]
    %v1075 = vld [vmem:[%s4] sm:$0xff]
    %v1076 = vld [vmem:[%s4 + $0x8] sm:$0xff]
    %v1077 = vld [vmem:[%s4 + $0x10] sm:$0xff]
    %v1078 = vld [vmem:[%s4 + $0x18] sm:$0xff]
    %v1079 = vld [vmem:[%s6] sm:$0x1]
    %v1081 = vlaneseq
    %v1082 = vshrl.u32 %v1081, 7
    %v1083 = vsub.s32 0, %v1082
    %v1084 = vrot.slane %v1079, %v1083
    %v1087 = vsel %vm232, %v1067, 0
    %v1090 = vsel %vm232, %v1068, 0
    %v1093 = vsel %vm232, %v1069, 0
    %v1096 = vsel %vm232, %v1070, 0
    %v1099 = vsel %vm232, %v1071, 0
    %v1102 = vsel %vm232, %v1072, 0
    %v1105 = vsel %vm232, %v1073, 0
    %v1108 = vsel %vm232, %v1074, 0
    %1110 = vmatprep.subr.mxu0 0.0
    %1111 = vmatpush1.msra.mxu0 %v1075
    %1112 = vmatprep.subr.mxu0 0.0
    %1113 = vmatpush1.msra.mxu0 %v1076
    %1114 = vmatprep.subr.mxu0 0.0
    %1115 = vmatpush1.msra.mxu0 %v1077
    %1116 = vmatprep.subr.mxu0 0.0
    %1117 = vmatpush1.msra.mxu0 %v1078
    %1118 = vmatprep.subr.mxu0 0.0
    %1119 = vmatpush1.msra.mxu0 0.0
    %1120 = vmatprep.subr.mxu0 0.0
    %1121 = vmatpush1.msra.mxu0 0.0
    %1122 = vmatprep.subr.mxu0 0.0
    %1123 = vmatpush1.msra.mxu0 0.0
    %1124 = vmatprep.subr.mxu0 0.0
    %1125 = vmatpush1.msra.mxu0 0.0
    %1126 = vmatprep.subr.mxu0 0.0
    %1127 = vmatpush1.msra.mxu0 0.0
    %1128 = vmatprep.subr.mxu0 0.0
    %1129 = vmatpush1.msra.mxu0 0.0
    %1130 = vmatprep.subr.mxu0 0.0
    %1131 = vmatpush1.msra.mxu0 0.0
    %1132 = vmatprep.subr.mxu0 0.0
    %1133 = vmatpush1.msra.mxu0 0.0
    %1134 = vmatprep.subr.mxu0 0.0
    %1135 = vmatpush1.msra.mxu0 0.0
    %1136 = vmatprep.subr.mxu0 0.0
    %1137 = vmatpush1.msra.mxu0 0.0
    %1138 = vmatprep.subr.mxu0 0.0
    %1139 = vmatpush1.msra.mxu0 0.0
    %1140 = vmatprep.subr.mxu0 0.0
    %1141 = vmatpush1.msra.mxu0 0.0
    %1142 = vmatprep.subr.mxu0 0.0
    %1143 = vmatpush1.msra.mxu0 0.0
    %1144 = vmatprep.subr.mxu0 0.0
    %1145 = vmatpush1.msra.mxu0 0.0
    %1146 = vmatprep.subr.mxu0 0.0
    %1147 = vmatpush1.msra.mxu0 0.0
    %1148 = vmatprep.subr.mxu0 0.0
    %1149 = vmatpush1.msra.mxu0 0.0
    %1150 = vmatprep.subr.mxu0 0.0
    %1151 = vmatpush1.msra.mxu0 0.0
    %1152 = vmatprep.subr.mxu0 0.0
    %1153 = vmatpush1.msra.mxu0 0.0
    %1154 = vmatprep.subr.mxu0 0.0
    %1155 = vmatpush1.msra.mxu0 0.0
    %1156 = vmatprep.subr.mxu0 0.0
    %1157 = vmatpush1.msra.mxu0 0.0
    %1158 = vmatprep.subr.mxu0 0.0
    %1159 = vmatpush1.msra.mxu0 0.0
    %1160 = vmatprep.subr.mxu0 0.0
    %1161 = vmatpush1.msra.mxu0 0.0
    %1162 = vmatprep.subr.mxu0 0.0
    %1163 = vmatpush1.msra.mxu0 0.0
    %1164 = vmatprep.subr.mxu0 0.0
    %1165 = vmatpush1.msra.mxu0 0.0
    %1166 = vmatprep.subr.mxu0 0.0
    %1167 = vmatpush1.msra.mxu0 0.0
    %1168 = vmatprep.subr.mxu0 0.0
    %1169 = vmatpush1.msra.mxu0 0.0
    %1170 = vmatprep.subr.mxu0 0.0
    %1171 = vmatpush1.msra.mxu0 0.0
    %1172 = vmatprep.subr.mxu0 0.0
    %1173 = vmatpush1.msra.mxu0 0.0
    %1174 = vmatprep.mubr.f32.mxu0 0.0
    %1175 = vmatmul.mubr.f32.gmra.mrb[0].mxu0 %v1087
    %v1176 = vpop.f32.mrb[0].mxu0
    %v1177 = vadd.f32 %v1084, %v1176
    %v1178 = vpop.f32.mrb[0].mxu0
    %1179 = vmatprep.mubr.f32.mxu0 0.0
    %1180 = vmatmul.mubr.f32.gmra.mrb[0].mxu0 %v1090
    %v1181 = vpop.f32.mrb[0].mxu0
    %v1182 = vadd.f32 %v1084, %v1181
    %v1183 = vpop.f32.mrb[0].mxu0
    %1184 = vmatprep.mubr.f32.mxu0 0.0
    %1185 = vmatmul.mubr.f32.gmra.mrb[0].mxu0 %v1093
    %v1186 = vpop.f32.mrb[0].mxu0
    %v1187 = vadd.f32 %v1084, %v1186
    %v1188 = vpop.f32.mrb[0].mxu0
    %1189 = vmatprep.mubr.f32.mxu0 0.0
    %1190 = vmatmul.mubr.f32.gmra.mrb[0].mxu0 %v1096
    %v1191 = vpop.f32.mrb[0].mxu0
    %v1192 = vadd.f32 %v1084, %v1191
    %v1193 = vpop.f32.mrb[0].mxu0
    %1194 = vmatprep.mubr.f32.mxu0 0.0
    %1195 = vmatmul.mubr.f32.gmra.mrb[0].mxu0 %v1099
    %v1196 = vpop.f32.mrb[0].mxu0
    %v1197 = vadd.f32 %v1084, %v1196
    %v1198 = vpop.f32.mrb[0].mxu0
    %1199 = vmatprep.mubr.f32.mxu0 0.0
    %1200 = vmatmul.mubr.f32.gmra.mrb[0].mxu0 %v1102
    %v1201 = vpop.f32.mrb[0].mxu0
    %v1202 = vadd.f32 %v1084, %v1201
    %v1203 = vpop.f32.mrb[0].mxu0
    %1204 = vmatprep.mubr.f32.mxu0 0.0
    %1205 = vmatmul.mubr.f32.gmra.mrb[0].mxu0 %v1105
    %v1206 = vpop.f32.mrb[0].mxu0
    %v1207 = vadd.f32 %v1084, %v1206
    %v1208 = vpop.f32.mrb[0].mxu0
    %1209 = vmatprep.mubr.f32.mxu0 0.0
    %1210 = vmatmul.mubr.f32.gmra.mrb[0].mxu0 %v1108
    %v1211 = vpop.f32.mrb[0].mxu0
    %v1212 = vadd.f32 %v1084, %v1211
    %v1213 = vpop.f32.mrb[0].mxu0
    %1214 = vdwg.mxu0
    %1215 = vst [vmem:[#allocation5] sm:$0xff] %v1177
    %1216 = vst [vmem:[#allocation5 + $0x8] sm:$0xff] %v1182
    %1217 = vst [vmem:[#allocation5 + $0x10] sm:$0xff] %v1187
    %1218 = vst [vmem:[#allocation5 + $0x18] sm:$0xff] %v1192
    %1219 = vst [vmem:[#allocation5 + $0x20] sm:$0xff] %v1197
    %1220 = vst [vmem:[#allocation5 + $0x28] sm:$0xff] %v1202
    %1221 = vst [vmem:[#allocation5 + $0x30] sm:$0xff] %v1207
    %1222 = vst [vmem:[#allocation5 + $0x38] sm:$0xff] %v1212
    %v1223 = vld [vmem:[%s5] sm:$0xff]
    %v1224 = vld [vmem:[%s5 + $0x8] sm:$0xff]
    %v1225 = vld [vmem:[%s5 + $0x10] sm:$0xff]
    %v1226 = vld [vmem:[%s5 + $0x18] sm:$0xff]
    %s1227 = scalar_lea.vmem [#allocation2], 8
    %v1228 = vld [vmem:[%s1227] sm:$0xff]
    %s1229 = scalar_lea.vmem [#allocation3], 8
    %v1230 = vld [vmem:[%s1229] sm:$0xff]
    %v1231 = vld [vmem:[#allocation5] sm:$0xff]
    %v1233 = vsel %vm232, %v1228, 0
    %1235 = vmatprep.subr.mxu0 0.0
    %1236 = vmatpush1.msra.mxu0 %v1223
    %1237 = vmatprep.subr.mxu0 0.0
    %1238 = vmatpush1.msra.mxu0 %v1224
    %1239 = vmatprep.subr.mxu0 0.0
    %1240 = vmatpush1.msra.mxu0 %v1225
    %1241 = vmatprep.subr.mxu0 0.0
    %1242 = vmatpush1.msra.mxu0 %v1226
    %1243 = vmatprep.subr.mxu0 0.0
    %1244 = vmatpush1.msra.mxu0 0.0
    %1245 = vmatprep.subr.mxu0 0.0
    %1246 = vmatpush1.msra.mxu0 0.0
    %1247 = vmatprep.subr.mxu0 0.0
    %1248 = vmatpush1.msra.mxu0 0.0
    %1249 = vmatprep.subr.mxu0 0.0
    %1250 = vmatpush1.msra.mxu0 0.0
    %1251 = vmatprep.subr.mxu0 0.0
    %1252 = vmatpush1.msra.mxu0 0.0
    %1253 = vmatprep.subr.mxu0 0.0
    %1254 = vmatpush1.msra.mxu0 0.0
    %1255 = vmatprep.subr.mxu0 0.0
    %1256 = vmatpush1.msra.mxu0 0.0
    %1257 = vmatprep.subr.mxu0 0.0
    %1258 = vmatpush1.msra.mxu0 0.0
    %1259 = vmatprep.subr.mxu0 0.0
    %1260 = vmatpush1.msra.mxu0 0.0
    %1261 = vmatprep.subr.mxu0 0.0
    %1262 = vmatpush1.msra.mxu0 0.0
    %1263 = vmatprep.subr.mxu0 0.0
    %1264 = vmatpush1.msra.mxu0 0.0
    %1265 = vmatprep.subr.mxu0 0.0
    %1266 = vmatpush1.msra.mxu0 0.0
    %1267 = vmatprep.subr.mxu0 0.0
    %1268 = vmatpush1.msra.mxu0 0.0
    %1269 = vmatprep.subr.mxu0 0.0
    %1270 = vmatpush1.msra.mxu0 0.0
    %1271 = vmatprep.subr.mxu0 0.0
    %1272 = vmatpush1.msra.mxu0 0.0
    %1273 = vmatprep.subr.mxu0 0.0
    %1274 = vmatpush1.msra.mxu0 0.0
    %1275 = vmatprep.subr.mxu0 0.0
    %1276 = vmatpush1.msra.mxu0 0.0
    %1277 = vmatprep.subr.mxu0 0.0
    %1278 = vmatpush1.msra.mxu0 0.0
    %1279 = vmatprep.subr.mxu0 0.0
    %1280 = vmatpush1.msra.mxu0 0.0
    %1281 = vmatprep.subr.mxu0 0.0
    %1282 = vmatpush1.msra.mxu0 0.0
    %1283 = vmatprep.subr.mxu0 0.0
    %1284 = vmatpush1.msra.mxu0 0.0
    %1285 = vmatprep.subr.mxu0 0.0
    %1286 = vmatpush1.msra.mxu0 0.0
    %1287 = vmatprep.subr.mxu0 0.0
    %1288 = vmatpush1.msra.mxu0 0.0
    %1289 = vmatprep.subr.mxu0 0.0
    %1290 = vmatpush1.msra.mxu0 0.0
    %1291 = vmatprep.subr.mxu0 0.0
    %1292 = vmatpush1.msra.mxu0 0.0
    %1293 = vmatprep.subr.mxu0 0.0
    %1294 = vmatpush1.msra.mxu0 0.0
    %1295 = vmatprep.subr.mxu0 0.0
    %1296 = vmatpush1.msra.mxu0 0.0
    %1297 = vmatprep.subr.mxu0 0.0
    %1298 = vmatpush1.msra.mxu0 0.0
    %1299 = vmatprep.mubr.f32.mxu0 0.0
    %1300 = vmatmul.mubr.f32.gmra.mrb[0].mxu0 %v1233
    %v1301 = vpop.f32.mrb[0].mxu0
    %v1302 = vadd.f32 0.0, %v1301
    %v1303 = vpop.f32.mrb[0].mxu0
    %1304 = vdwg.mxu0
    %v1305 = vadd.f32 %v1231, %v1302
    %v1306 = vxor.u32 %v1305, 2147483648
    %v1307 = vmul.f32 %v1306, 1.442695
    %v1308 = vpow.pop %v1307
    %v1309 = vadd.f32 %v1308, 1.0
    %v1310 = vrcp.pop %v1309
    %v1311 = vmul.f32 1.0, %v1310
    %v1312 = vtanh.pop %v1305
    %1314 = vrot.lane.b32.xlu0 %v1230, 32
    %v1315 = vpop.permute.xlu0 %1314
    %v1317 = vmul.f32 %v1311, %v1315
    %1319 = vrot.lane.b32.xlu0 %v1312, 32
    %v1320 = vpop.permute.xlu0 %1319
    %v1322 = vmul.f32 %v1311, %v1320
    %1324 = vrot.lane.b32.xlu0 %v1322, 32
    %v1325 = vpop.permute.xlu0 %1324
    %v1327 = vadd.f32 %v1317, %v1325
    %v1328 = vtanh.pop %v1327
    %1330 = vrot.lane.b32.xlu0 %v1328, 32
    %v1331 = vpop.permute.xlu0 %1330
    %v1333 = vmul.f32 %v1311, %v1331
    %1335 = vrot.lane.b32.xlu0 %v1333, 64
    %v1336 = vpop.permute.xlu0 %1335
    %1338 = vst.msk [vmem:[#allocation4] sm:$0xff] %vm232, %v1336
    %v1339 = vld [vmem:[#allocation5 + $0x8] sm:$0xff]
    %v1340 = vsel %vm232, %v1336, 0
    %1342 = vmatprep.subr.mxu0 0.0
    %1343 = vmatpush1.msra.mxu0 %v1223
    %1344 = vmatprep.subr.mxu0 0.0
    %1345 = vmatpush1.msra.mxu0 %v1224
    %1346 = vmatprep.subr.mxu0 0.0
    %1347 = vmatpush1.msra.mxu0 %v1225
    %1348 = vmatprep.subr.mxu0 0.0
    %1349 = vmatpush1.msra.mxu0 %v1226
    %1350 = vmatprep.subr.mxu0 0.0
    %1351 = vmatpush1.msra.mxu0 0.0
    %1352 = vmatprep.subr.mxu0 0.0
    %1353 = vmatpush1.msra.mxu0 0.0
    %1354 = vmatprep.subr.mxu0 0.0
    %1355 = vmatpush1.msra.mxu0 0.0
    %1356 = vmatprep.subr.mxu0 0.0
    %1357 = vmatpush1.msra.mxu0 0.0
    %1358 = vmatprep.subr.mxu0 0.0
    %1359 = vmatpush1.msra.mxu0 0.0
    %1360 = vmatprep.subr.mxu0 0.0
    %1361 = vmatpush1.msra.mxu0 0.0
    %1362 = vmatprep.subr.mxu0 0.0
    %1363 = vmatpush1.msra.mxu0 0.0
    %1364 = vmatprep.subr.mxu0 0.0
    %1365 = vmatpush1.msra.mxu0 0.0
    %1366 = vmatprep.subr.mxu0 0.0
    %1367 = vmatpush1.msra.mxu0 0.0
    %1368 = vmatprep.subr.mxu0 0.0
    %1369 = vmatpush1.msra.mxu0 0.0
    %1370 = vmatprep.subr.mxu0 0.0
    %1371 = vmatpush1.msra.mxu0 0.0
    %1372 = vmatprep.subr.mxu0 0.0
    %1373 = vmatpush1.msra.mxu0 0.0
    %1374 = vmatprep.subr.mxu0 0.0
    %1375 = vmatpush1.msra.mxu0 0.0
    %1376 = vmatprep.subr.mxu0 0.0
    %1377 = vmatpush1.msra.mxu0 0.0
    %1378 = vmatprep.subr.mxu0 0.0
    %1379 = vmatpush1.msra.mxu0 0.0
    %1380 = vmatprep.subr.mxu0 0.0
    %1381 = vmatpush1.msra.mxu0 0.0
    %1382 = vmatprep.subr.mxu0 0.0
    %1383 = vmatpush1.msra.mxu0 0.0
    %1384 = vmatprep.subr.mxu0 0.0
    %1385 = vmatpush1.msra.mxu0 0.0
    %1386 = vmatprep.subr.mxu0 0.0
    %1387 = vmatpush1.msra.mxu0 0.0
    %1388 = vmatprep.subr.mxu0 0.0
    %1389 = vmatpush1.msra.mxu0 0.0
    %1390 = vmatprep.subr.mxu0 0.0
    %1391 = vmatpush1.msra.mxu0 0.0
    %1392 = vmatprep.subr.mxu0 0.0
    %1393 = vmatpush1.msra.mxu0 0.0
    %1394 = vmatprep.subr.mxu0 0.0
    %1395 = vmatpush1.msra.mxu0 0.0
    %1396 = vmatprep.subr.mxu0 0.0
    %1397 = vmatpush1.msra.mxu0 0.0
    %1398 = vmatprep.subr.mxu0 0.0
    %1399 = vmatpush1.msra.mxu0 0.0
    %1400 = vmatprep.subr.mxu0 0.0
    %1401 = vmatpush1.msra.mxu0 0.0
    %1402 = vmatprep.subr.mxu0 0.0
    %1403 = vmatpush1.msra.mxu0 0.0
    %1404 = vmatprep.subr.mxu0 0.0
    %1405 = vmatpush1.msra.mxu0 0.0
    %1406 = vmatprep.mubr.f32.mxu0 0.0
    %1407 = vmatmul.mubr.f32.gmra.mrb[0].mxu0 %v1340
    %v1408 = vpop.f32.mrb[0].mxu0
    %v1409 = vadd.f32 0.0, %v1408
    %v1410 = vpop.f32.mrb[0].mxu0
    %1411 = vdwg.mxu0
    %v1412 = vadd.f32 %v1339, %v1409
    %v1413 = vxor.u32 %v1412, 2147483648
    %v1414 = vmul.f32 %v1413, 1.442695
    %v1415 = vpow.pop %v1414
    %v1416 = vadd.f32 %v1415, 1.0
    %v1417 = vrcp.pop %v1416
    %v1418 = vmul.f32 1.0, %v1417
    %v1419 = vtanh.pop %v1412
    %v1420 = vmul.f32 %v1418, %v1327
    %1422 = vrot.lane.b32.xlu0 %v1419, 32
    %v1423 = vpop.permute.xlu0 %1422
    %v1425 = vmul.f32 %v1418, %v1423
    %1427 = vrot.lane.b32.xlu0 %v1425, 32
    %v1428 = vpop.permute.xlu0 %1427
    %v1430 = vadd.f32 %v1420, %v1428
    %v1431 = vtanh.pop %v1430
    %1433 = vrot.lane.b32.xlu0 %v1431, 32
    %v1434 = vpop.permute.xlu0 %1433
    %v1436 = vmul.f32 %v1418, %v1434
    %1438 = vrot.lane.b32.xlu0 %v1436, 64
    %v1439 = vpop.permute.xlu0 %1438
    %1441 = vst.msk [vmem:[#allocation4 + $0x8] sm:$0xff] %vm232, %v1439
    %v1442 = vld [vmem:[#allocation5 + $0x10] sm:$0xff]
    %v1443 = vsel %vm232, %v1439, 0
    %1445 = vmatprep.subr.mxu0 0.0
    %1446 = vmatpush1.msra.mxu0 %v1223
    %1447 = vmatprep.subr.mxu0 0.0
    %1448 = vmatpush1.msra.mxu0 %v1224
    %1449 = vmatprep.subr.mxu0 0.0
    %1450 = vmatpush1.msra.mxu0 %v1225
    %1451 = vmatprep.subr.mxu0 0.0
    %1452 = vmatpush1.msra.mxu0 %v1226
    %1453 = vmatprep.subr.mxu0 0.0
    %1454 = vmatpush1.msra.mxu0 0.0
    %1455 = vmatprep.subr.mxu0 0.0
    %1456 = vmatpush1.msra.mxu0 0.0
    %1457 = vmatprep.subr.mxu0 0.0
    %1458 = vmatpush1.msra.mxu0 0.0
    %1459 = vmatprep.subr.mxu0 0.0
    %1460 = vmatpush1.msra.mxu0 0.0
    %1461 = vmatprep.subr.mxu0 0.0
    %1462 = vmatpush1.msra.mxu0 0.0
    %1463 = vmatprep.subr.mxu0 0.0
    %1464 = vmatpush1.msra.mxu0 0.0
    %1465 = vmatprep.subr.mxu0 0.0
    %1466 = vmatpush1.msra.mxu0 0.0
    %1467 = vmatprep.subr.mxu0 0.0
    %1468 = vmatpush1.msra.mxu0 0.0
    %1469 = vmatprep.subr.mxu0 0.0
    %1470 = vmatpush1.msra.mxu0 0.0
    %1471 = vmatprep.subr.mxu0 0.0
    %1472 = vmatpush1.msra.mxu0 0.0
    %1473 = vmatprep.subr.mxu0 0.0
    %1474 = vmatpush1.msra.mxu0 0.0
    %1475 = vmatprep.subr.mxu0 0.0
    %1476 = vmatpush1.msra.mxu0 0.0
    %1477 = vmatprep.subr.mxu0 0.0
    %1478 = vmatpush1.msra.mxu0 0.0
    %1479 = vmatprep.subr.mxu0 0.0
    %1480 = vmatpush1.msra.mxu0 0.0
    %1481 = vmatprep.subr.mxu0 0.0
    %1482 = vmatpush1.msra.mxu0 0.0
    %1483 = vmatprep.subr.mxu0 0.0
    %1484 = vmatpush1.msra.mxu0 0.0
    %1485 = vmatprep.subr.mxu0 0.0
    %1486 = vmatpush1.msra.mxu0 0.0
    %1487 = vmatprep.subr.mxu0 0.0
    %1488 = vmatpush1.msra.mxu0 0.0
    %1489 = vmatprep.subr.mxu0 0.0
    %1490 = vmatpush1.msra.mxu0 0.0
    %1491 = vmatprep.subr.mxu0 0.0
    %1492 = vmatpush1.msra.mxu0 0.0
    %1493 = vmatprep.subr.mxu0 0.0
    %1494 = vmatpush1.msra.mxu0 0.0
    %1495 = vmatprep.subr.mxu0 0.0
    %1496 = vmatpush1.msra.mxu0 0.0
    %1497 = vmatprep.subr.mxu0 0.0
    %1498 = vmatpush1.msra.mxu0 0.0
    %1499 = vmatprep.subr.mxu0 0.0
    %1500 = vmatpush1.msra.mxu0 0.0
    %1501 = vmatprep.subr.mxu0 0.0
    %1502 = vmatpush1.msra.mxu0 0.0
    %1503 = vmatprep.subr.mxu0 0.0
    %1504 = vmatpush1.msra.mxu0 0.0
    %1505 = vmatprep.subr.mxu0 0.0
    %1506 = vmatpush1.msra.mxu0 0.0
    %1507 = vmatprep.subr.mxu0 0.0
    %1508 = vmatpush1.msra.mxu0 0.0
    %1509 = vmatprep.mubr.f32.mxu0 0.0
    %1510 = vmatmul.mubr.f32.gmra.mrb[0].mxu0 %v1443
    %v1511 = vpop.f32.mrb[0].mxu0
    %v1512 = vadd.f32 0.0, %v1511
    %v1513 = vpop.f32.mrb[0].mxu0
    %1514 = vdwg.mxu0
    %v1515 = vadd.f32 %v1442, %v1512
    %v1516 = vxor.u32 %v1515, 2147483648
    %v1517 = vmul.f32 %v1516, 1.442695
    %v1518 = vpow.pop %v1517
    %v1519 = vadd.f32 %v1518, 1.0
    %v1520 = vrcp.pop %v1519
    %v1521 = vmul.f32 1.0, %v1520
    %v1522 = vtanh.pop %v1515
    %v1523 = vmul.f32 %v1521, %v1430
    %1525 = vrot.lane.b32.xlu0 %v1522, 32
    %v1526 = vpop.permute.xlu0 %1525
    %v1528 = vmul.f32 %v1521, %v1526
    %1530 = vrot.lane.b32.xlu0 %v1528, 32
    %v1531 = vpop.permute.xlu0 %1530
    %v1533 = vadd.f32 %v1523, %v1531
    %v1534 = vtanh.pop %v1533
    %1536 = vrot.lane.b32.xlu0 %v1534, 32
    %v1537 = vpop.permute.xlu0 %1536
    %v1539 = vmul.f32 %v1521, %v1537
    %1541 = vrot.lane.b32.xlu0 %v1539, 64
    %v1542 = vpop.permute.xlu0 %1541
    %1544 = vst.msk [vmem:[#allocation4 + $0x10] sm:$0xff] %vm232, %v1542
    %v1545 = vld [vmem:[#allocation5 + $0x18] sm:$0xff]
    %v1546 = vsel %vm232, %v1542, 0
    %1548 = vmatprep.subr.mxu0 0.0
    %1549 = vmatpush1.msra.mxu0 %v1223
    %1550 = vmatprep.subr.mxu0 0.0
    %1551 = vmatpush1.msra.mxu0 %v1224
    %1552 = vmatprep.subr.mxu0 0.0
    %1553 = vmatpush1.msra.mxu0 %v1225
    %1554 = vmatprep.subr.mxu0 0.0
    %1555 = vmatpush1.msra.mxu0 %v1226
    %1556 = vmatprep.subr.mxu0 0.0
    %1557 = vmatpush1.msra.mxu0 0.0
    %1558 = vmatprep.subr.mxu0 0.0
    %1559 = vmatpush1.msra.mxu0 0.0
    %1560 = vmatprep.subr.mxu0 0.0
    %1561 = vmatpush1.msra.mxu0 0.0
    %1562 = vmatprep.subr.mxu0 0.0
    %1563 = vmatpush1.msra.mxu0 0.0
    %1564 = vmatprep.subr.mxu0 0.0
    %1565 = vmatpush1.msra.mxu0 0.0
    %1566 = vmatprep.subr.mxu0 0.0
    %1567 = vmatpush1.msra.mxu0 0.0
    %1568 = vmatprep.subr.mxu0 0.0
    %1569 = vmatpush1.msra.mxu0 0.0
    %1570 = vmatprep.subr.mxu0 0.0
    %1571 = vmatpush1.msra.mxu0 0.0
    %1572 = vmatprep.subr.mxu0 0.0
    %1573 = vmatpush1.msra.mxu0 0.0
    %1574 = vmatprep.subr.mxu0 0.0
    %1575 = vmatpush1.msra.mxu0 0.0
    %1576 = vmatprep.subr.mxu0 0.0
    %1577 = vmatpush1.msra.mxu0 0.0
    %1578 = vmatprep.subr.mxu0 0.0
    %1579 = vmatpush1.msra.mxu0 0.0
    %1580 = vmatprep.subr.mxu0 0.0
    %1581 = vmatpush1.msra.mxu0 0.0
    %1582 = vmatprep.subr.mxu0 0.0
    %1583 = vmatpush1.msra.mxu0 0.0
    %1584 = vmatprep.subr.mxu0 0.0
    %1585 = vmatpush1.msra.mxu0 0.0
    %1586 = vmatprep.subr.mxu0 0.0
    %1587 = vmatpush1.msra.mxu0 0.0
    %1588 = vmatprep.subr.mxu0 0.0
    %1589 = vmatpush1.msra.mxu0 0.0
    %1590 = vmatprep.subr.mxu0 0.0
    %1591 = vmatpush1.msra.mxu0 0.0
    %1592 = vmatprep.subr.mxu0 0.0
    %1593 = vmatpush1.msra.mxu0 0.0
    %1594 = vmatprep.subr.mxu0 0.0
    %1595 = vmatpush1.msra.mxu0 0.0
    %1596 = vmatprep.subr.mxu0 0.0
    %1597 = vmatpush1.msra.mxu0 0.0
    %1598 = vmatprep.subr.mxu0 0.0
    %1599 = vmatpush1.msra.mxu0 0.0
    %1600 = vmatprep.subr.mxu0 0.0
    %1601 = vmatpush1.msra.mxu0 0.0
    %1602 = vmatprep.subr.mxu0 0.0
    %1603 = vmatpush1.msra.mxu0 0.0
    %1604 = vmatprep.subr.mxu0 0.0
    %1605 = vmatpush1.msra.mxu0 0.0
    %1606 = vmatprep.subr.mxu0 0.0
    %1607 = vmatpush1.msra.mxu0 0.0
    %1608 = vmatprep.subr.mxu0 0.0
    %1609 = vmatpush1.msra.mxu0 0.0
    %1610 = vmatprep.subr.mxu0 0.0
    %1611 = vmatpush1.msra.mxu0 0.0
    %1612 = vmatprep.mubr.f32.mxu0 0.0
    %1613 = vmatmul.mubr.f32.gmra.mrb[0].mxu0 %v1546
    %v1614 = vpop.f32.mrb[0].mxu0
    %v1615 = vadd.f32 0.0, %v1614
    %v1616 = vpop.f32.mrb[0].mxu0
    %1617 = vdwg.mxu0
    %v1618 = vadd.f32 %v1545, %v1615
    %v1619 = vxor.u32 %v1618, 2147483648
    %v1620 = vmul.f32 %v1619, 1.442695
    %v1621 = vpow.pop %v1620
    %v1622 = vadd.f32 %v1621, 1.0
    %v1623 = vrcp.pop %v1622
    %v1624 = vmul.f32 1.0, %v1623
    %v1625 = vtanh.pop %v1618
    %v1626 = vmul.f32 %v1624, %v1533
    %1628 = vrot.lane.b32.xlu0 %v1625, 32
    %v1629 = vpop.permute.xlu0 %1628
    %v1631 = vmul.f32 %v1624, %v1629
    %1633 = vrot.lane.b32.xlu0 %v1631, 32
    %v1634 = vpop.permute.xlu0 %1633
    %v1636 = vadd.f32 %v1626, %v1634
    %v1637 = vtanh.pop %v1636
    %1639 = vrot.lane.b32.xlu0 %v1637, 32
    %v1640 = vpop.permute.xlu0 %1639
    %v1642 = vmul.f32 %v1624, %v1640
    %1644 = vrot.lane.b32.xlu0 %v1642, 64
    %v1645 = vpop.permute.xlu0 %1644
    %1647 = vst.msk [vmem:[#allocation4 + $0x18] sm:$0xff] %vm232, %v1645
    %v1648 = vld [vmem:[#allocation5 + $0x20] sm:$0xff]
    %v1649 = vsel %vm232, %v1645, 0
    %1651 = vmatprep.subr.mxu0 0.0
    %1652 = vmatpush1.msra.mxu0 %v1223
    %1653 = vmatprep.subr.mxu0 0.0
    %1654 = vmatpush1.msra.mxu0 %v1224
    %1655 = vmatprep.subr.mxu0 0.0
    %1656 = vmatpush1.msra.mxu0 %v1225
    %1657 = vmatprep.subr.mxu0 0.0
    %1658 = vmatpush1.msra.mxu0 %v1226
    %1659 = vmatprep.subr.mxu0 0.0
    %1660 = vmatpush1.msra.mxu0 0.0
    %1661 = vmatprep.subr.mxu0 0.0
    %1662 = vmatpush1.msra.mxu0 0.0
    %1663 = vmatprep.subr.mxu0 0.0
    %1664 = vmatpush1.msra.mxu0 0.0
    %1665 = vmatprep.subr.mxu0 0.0
    %1666 = vmatpush1.msra.mxu0 0.0
    %1667 = vmatprep.subr.mxu0 0.0
    %1668 = vmatpush1.msra.mxu0 0.0
    %1669 = vmatprep.subr.mxu0 0.0
    %1670 = vmatpush1.msra.mxu0 0.0
    %1671 = vmatprep.subr.mxu0 0.0
    %1672 = vmatpush1.msra.mxu0 0.0
    %1673 = vmatprep.subr.mxu0 0.0
    %1674 = vmatpush1.msra.mxu0 0.0
    %1675 = vmatprep.subr.mxu0 0.0
    %1676 = vmatpush1.msra.mxu0 0.0
    %1677 = vmatprep.subr.mxu0 0.0
    %1678 = vmatpush1.msra.mxu0 0.0
    %1679 = vmatprep.subr.mxu0 0.0
    %1680 = vmatpush1.msra.mxu0 0.0
    %1681 = vmatprep.subr.mxu0 0.0
    %1682 = vmatpush1.msra.mxu0 0.0
    %1683 = vmatprep.subr.mxu0 0.0
    %1684 = vmatpush1.msra.mxu0 0.0
    %1685 = vmatprep.subr.mxu0 0.0
    %1686 = vmatpush1.msra.mxu0 0.0
    %1687 = vmatprep.subr.mxu0 0.0
    %1688 = vmatpush1.msra.mxu0 0.0
    %1689 = vmatprep.subr.mxu0 0.0
    %1690 = vmatpush1.msra.mxu0 0.0
    %1691 = vmatprep.subr.mxu0 0.0
    %1692 = vmatpush1.msra.mxu0 0.0
    %1693 = vmatprep.subr.mxu0 0.0
    %1694 = vmatpush1.msra.mxu0 0.0
    %1695 = vmatprep.subr.mxu0 0.0
    %1696 = vmatpush1.msra.mxu0 0.0
    %1697 = vmatprep.subr.mxu0 0.0
    %1698 = vmatpush1.msra.mxu0 0.0
    %1699 = vmatprep.subr.mxu0 0.0
    %1700 = vmatpush1.msra.mxu0 0.0
    %1701 = vmatprep.subr.mxu0 0.0
    %1702 = vmatpush1.msra.mxu0 0.0
    %1703 = vmatprep.subr.mxu0 0.0
    %1704 = vmatpush1.msra.mxu0 0.0
    %1705 = vmatprep.subr.mxu0 0.0
    %1706 = vmatpush1.msra.mxu0 0.0
    %1707 = vmatprep.subr.mxu0 0.0
    %1708 = vmatpush1.msra.mxu0 0.0
    %1709 = vmatprep.subr.mxu0 0.0
    %1710 = vmatpush1.msra.mxu0 0.0
    %1711 = vmatprep.subr.mxu0 0.0
    %1712 = vmatpush1.msra.mxu0 0.0
    %1713 = vmatprep.subr.mxu0 0.0
    %1714 = vmatpush1.msra.mxu0 0.0
    %1715 = vmatprep.mubr.f32.mxu0 0.0
    %1716 = vmatmul.mubr.f32.gmra.mrb[0].mxu0 %v1649
    %v1717 = vpop.f32.mrb[0].mxu0
    %v1718 = vadd.f32 0.0, %v1717
    %v1719 = vpop.f32.mrb[0].mxu0
    %1720 = vdwg.mxu0
    %v1721 = vadd.f32 %v1648, %v1718
    %v1722 = vxor.u32 %v1721, 2147483648
    %v1723 = vmul.f32 %v1722, 1.442695
    %v1724 = vpow.pop %v1723
    %v1725 = vadd.f32 %v1724, 1.0
    %v1726 = vrcp.pop %v1725
    %v1727 = vmul.f32 1.0, %v1726
    %v1728 = vtanh.pop %v1721
    %v1729 = vmul.f32 %v1727, %v1636
    %1731 = vrot.lane.b32.xlu0 %v1728, 32
    %v1732 = vpop.permute.xlu0 %1731
    %v1734 = vmul.f32 %v1727, %v1732
    %1736 = vrot.lane.b32.xlu0 %v1734, 32
    %v1737 = vpop.permute.xlu0 %1736
    %v1739 = vadd.f32 %v1729, %v1737
    %v1740 = vtanh.pop %v1739
    %1742 = vrot.lane.b32.xlu0 %v1740, 32
    %v1743 = vpop.permute.xlu0 %1742
    %v1745 = vmul.f32 %v1727, %v1743
    %1747 = vrot.lane.b32.xlu0 %v1745, 64
    %v1748 = vpop.permute.xlu0 %1747
    %1750 = vst.msk [vmem:[#allocation4 + $0x20] sm:$0xff] %vm232, %v1748
    %v1751 = vld [vmem:[#allocation5 + $0x28] sm:$0xff]
    %v1752 = vsel %vm232, %v1748, 0
    %1754 = vmatprep.subr.mxu0 0.0
    %1755 = vmatpush1.msra.mxu0 %v1223
    %1756 = vmatprep.subr.mxu0 0.0
    %1757 = vmatpush1.msra.mxu0 %v1224
    %1758 = vmatprep.subr.mxu0 0.0
    %1759 = vmatpush1.msra.mxu0 %v1225
    %1760 = vmatprep.subr.mxu0 0.0
    %1761 = vmatpush1.msra.mxu0 %v1226
    %1762 = vmatprep.subr.mxu0 0.0
    %1763 = vmatpush1.msra.mxu0 0.0
    %1764 = vmatprep.subr.mxu0 0.0
    %1765 = vmatpush1.msra.mxu0 0.0
    %1766 = vmatprep.subr.mxu0 0.0
    %1767 = vmatpush1.msra.mxu0 0.0
    %1768 = vmatprep.subr.mxu0 0.0
    %1769 = vmatpush1.msra.mxu0 0.0
    %1770 = vmatprep.subr.mxu0 0.0
    %1771 = vmatpush1.msra.mxu0 0.0
    %1772 = vmatprep.subr.mxu0 0.0
    %1773 = vmatpush1.msra.mxu0 0.0
    %1774 = vmatprep.subr.mxu0 0.0
    %1775 = vmatpush1.msra.mxu0 0.0
    %1776 = vmatprep.subr.mxu0 0.0
    %1777 = vmatpush1.msra.mxu0 0.0
    %1778 = vmatprep.subr.mxu0 0.0
    %1779 = vmatpush1.msra.mxu0 0.0
    %1780 = vmatprep.subr.mxu0 0.0
    %1781 = vmatpush1.msra.mxu0 0.0
    %1782 = vmatprep.subr.mxu0 0.0
    %1783 = vmatpush1.msra.mxu0 0.0
    %1784 = vmatprep.subr.mxu0 0.0
    %1785 = vmatpush1.msra.mxu0 0.0
    %1786 = vmatprep.subr.mxu0 0.0
    %1787 = vmatpush1.msra.mxu0 0.0
    %1788 = vmatprep.subr.mxu0 0.0
    %1789 = vmatpush1.msra.mxu0 0.0
    %1790 = vmatprep.subr.mxu0 0.0
    %1791 = vmatpush1.msra.mxu0 0.0
    %1792 = vmatprep.subr.mxu0 0.0
    %1793 = vmatpush1.msra.mxu0 0.0
    %1794 = vmatprep.subr.mxu0 0.0
    %1795 = vmatpush1.msra.mxu0 0.0
    %1796 = vmatprep.subr.mxu0 0.0
    %1797 = vmatpush1.msra.mxu0 0.0
    %1798 = vmatprep.subr.mxu0 0.0
    %1799 = vmatpush1.msra.mxu0 0.0
    %1800 = vmatprep.subr.mxu0 0.0
    %1801 = vmatpush1.msra.mxu0 0.0
    %1802 = vmatprep.subr.mxu0 0.0
    %1803 = vmatpush1.msra.mxu0 0.0
    %1804 = vmatprep.subr.mxu0 0.0
    %1805 = vmatpush1.msra.mxu0 0.0
    %1806 = vmatprep.subr.mxu0 0.0
    %1807 = vmatpush1.msra.mxu0 0.0
    %1808 = vmatprep.subr.mxu0 0.0
    %1809 = vmatpush1.msra.mxu0 0.0
    %1810 = vmatprep.subr.mxu0 0.0
    %1811 = vmatpush1.msra.mxu0 0.0
    %1812 = vmatprep.subr.mxu0 0.0
    %1813 = vmatpush1.msra.mxu0 0.0
    %1814 = vmatprep.subr.mxu0 0.0
    %1815 = vmatpush1.msra.mxu0 0.0
    %1816 = vmatprep.subr.mxu0 0.0
    %1817 = vmatpush1.msra.mxu0 0.0
    %1818 = vmatprep.mubr.f32.mxu0 0.0
    %1819 = vmatmul.mubr.f32.gmra.mrb[0].mxu0 %v1752
    %v1820 = vpop.f32.mrb[0].mxu0
    %v1821 = vadd.f32 0.0, %v1820
    %v1822 = vpop.f32.mrb[0].mxu0
    %1823 = vdwg.mxu0
    %v1824 = vadd.f32 %v1751, %v1821
    %v1825 = vxor.u32 %v1824, 2147483648
    %v1826 = vmul.f32 %v1825, 1.442695
    %v1827 = vpow.pop %v1826
    %v1828 = vadd.f32 %v1827, 1.0
    %v1829 = vrcp.pop %v1828
    %v1830 = vmul.f32 1.0, %v1829
    %v1831 = vtanh.pop %v1824
    %v1832 = vmul.f32 %v1830, %v1739
    %1834 = vrot.lane.b32.xlu0 %v1831, 32
    %v1835 = vpop.permute.xlu0 %1834
    %v1837 = vmul.f32 %v1830, %v1835
    %1839 = vrot.lane.b32.xlu0 %v1837, 32
    %v1840 = vpop.permute.xlu0 %1839
    %v1842 = vadd.f32 %v1832, %v1840
    %v1843 = vtanh.pop %v1842
    %1845 = vrot.lane.b32.xlu0 %v1843, 32
    %v1846 = vpop.permute.xlu0 %1845
    %v1848 = vmul.f32 %v1830, %v1846
    %1850 = vrot.lane.b32.xlu0 %v1848, 64
    %v1851 = vpop.permute.xlu0 %1850
    %1853 = vst.msk [vmem:[#allocation4 + $0x28] sm:$0xff] %vm232, %v1851
    %v1854 = vld [vmem:[#allocation5 + $0x30] sm:$0xff]
    %v1855 = vsel %vm232, %v1851, 0
    %1857 = vmatprep.subr.mxu0 0.0
    %1858 = vmatpush1.msra.mxu0 %v1223
    %1859 = vmatprep.subr.mxu0 0.0
    %1860 = vmatpush1.msra.mxu0 %v1224
    %1861 = vmatprep.subr.mxu0 0.0
    %1862 = vmatpush1.msra.mxu0 %v1225
    %1863 = vmatprep.subr.mxu0 0.0
    %1864 = vmatpush1.msra.mxu0 %v1226
    %1865 = vmatprep.subr.mxu0 0.0
    %1866 = vmatpush1.msra.mxu0 0.0
    %1867 = vmatprep.subr.mxu0 0.0
    %1868 = vmatpush1.msra.mxu0 0.0
    %1869 = vmatprep.subr.mxu0 0.0
    %1870 = vmatpush1.msra.mxu0 0.0
    %1871 = vmatprep.subr.mxu0 0.0
    %1872 = vmatpush1.msra.mxu0 0.0
    %1873 = vmatprep.subr.mxu0 0.0
    %1874 = vmatpush1.msra.mxu0 0.0
    %1875 = vmatprep.subr.mxu0 0.0
    %1876 = vmatpush1.msra.mxu0 0.0
    %1877 = vmatprep.subr.mxu0 0.0
    %1878 = vmatpush1.msra.mxu0 0.0
    %1879 = vmatprep.subr.mxu0 0.0
    %1880 = vmatpush1.msra.mxu0 0.0
    %1881 = vmatprep.subr.mxu0 0.0
    %1882 = vmatpush1.msra.mxu0 0.0
    %1883 = vmatprep.subr.mxu0 0.0
    %1884 = vmatpush1.msra.mxu0 0.0
    %1885 = vmatprep.subr.mxu0 0.0
    %1886 = vmatpush1.msra.mxu0 0.0
    %1887 = vmatprep.subr.mxu0 0.0
    %1888 = vmatpush1.msra.mxu0 0.0
    %1889 = vmatprep.subr.mxu0 0.0
    %1890 = vmatpush1.msra.mxu0 0.0
    %1891 = vmatprep.subr.mxu0 0.0
    %1892 = vmatpush1.msra.mxu0 0.0
    %1893 = vmatprep.subr.mxu0 0.0
    %1894 = vmatpush1.msra.mxu0 0.0
    %1895 = vmatprep.subr.mxu0 0.0
    %1896 = vmatpush1.msra.mxu0 0.0
    %1897 = vmatprep.subr.mxu0 0.0
    %1898 = vmatpush1.msra.mxu0 0.0
    %1899 = vmatprep.subr.mxu0 0.0
    %1900 = vmatpush1.msra.mxu0 0.0
    %1901 = vmatprep.subr.mxu0 0.0
    %1902 = vmatpush1.msra.mxu0 0.0
    %1903 = vmatprep.subr.mxu0 0.0
    %1904 = vmatpush1.msra.mxu0 0.0
    %1905 = vmatprep.subr.mxu0 0.0
    %1906 = vmatpush1.msra.mxu0 0.0
    %1907 = vmatprep.subr.mxu0 0.0
    %1908 = vmatpush1.msra.mxu0 0.0
    %1909 = vmatprep.subr.mxu0 0.0
    %1910 = vmatpush1.msra.mxu0 0.0
    %1911 = vmatprep.subr.mxu0 0.0
    %1912 = vmatpush1.msra.mxu0 0.0
    %1913 = vmatprep.subr.mxu0 0.0
    %1914 = vmatpush1.msra.mxu0 0.0
    %1915 = vmatprep.subr.mxu0 0.0
    %1916 = vmatpush1.msra.mxu0 0.0
    %1917 = vmatprep.subr.mxu0 0.0
    %1918 = vmatpush1.msra.mxu0 0.0
    %1919 = vmatprep.subr.mxu0 0.0
    %1920 = vmatpush1.msra.mxu0 0.0
    %1921 = vmatprep.mubr.f32.mxu0 0.0
    %1922 = vmatmul.mubr.f32.gmra.mrb[0].mxu0 %v1855
    %v1923 = vpop.f32.mrb[0].mxu0
    %v1924 = vadd.f32 0.0, %v1923
    %v1925 = vpop.f32.mrb[0].mxu0
    %1926 = vdwg.mxu0
    %v1927 = vadd.f32 %v1854, %v1924
    %v1928 = vxor.u32 %v1927, 2147483648
    %v1929 = vmul.f32 %v1928, 1.442695
    %v1930 = vpow.pop %v1929
    %v1931 = vadd.f32 %v1930, 1.0
    %v1932 = vrcp.pop %v1931
    %v1933 = vmul.f32 1.0, %v1932
    %v1934 = vtanh.pop %v1927
    %v1935 = vmul.f32 %v1933, %v1842
    %1937 = vrot.lane.b32.xlu0 %v1934, 32
    %v1938 = vpop.permute.xlu0 %1937
    %v1940 = vmul.f32 %v1933, %v1938
    %1942 = vrot.lane.b32.xlu0 %v1940, 32
    %v1943 = vpop.permute.xlu0 %1942
    %v1945 = vadd.f32 %v1935, %v1943
    %v1946 = vtanh.pop %v1945
    %1948 = vrot.lane.b32.xlu0 %v1946, 32
    %v1949 = vpop.permute.xlu0 %1948
    %v1951 = vmul.f32 %v1933, %v1949
    %1953 = vrot.lane.b32.xlu0 %v1951, 64
    %v1954 = vpop.permute.xlu0 %1953
    %1956 = vst.msk [vmem:[#allocation4 + $0x30] sm:$0xff] %vm232, %v1954
    %v1957 = vld [vmem:[#allocation5 + $0x38] sm:$0xff]
    %v1958 = vsel %vm232, %v1954, 0
    %1960 = vmatprep.subr.mxu0 0.0
    %1961 = vmatpush1.msra.mxu0 %v1223
    %1962 = vmatprep.subr.mxu0 0.0
    %1963 = vmatpush1.msra.mxu0 %v1224
    %1964 = vmatprep.subr.mxu0 0.0
    %1965 = vmatpush1.msra.mxu0 %v1225
    %1966 = vmatprep.subr.mxu0 0.0
    %1967 = vmatpush1.msra.mxu0 %v1226
    %1968 = vmatprep.subr.mxu0 0.0
    %1969 = vmatpush1.msra.mxu0 0.0
    %1970 = vmatprep.subr.mxu0 0.0
    %1971 = vmatpush1.msra.mxu0 0.0
    %1972 = vmatprep.subr.mxu0 0.0
    %1973 = vmatpush1.msra.mxu0 0.0
    %1974 = vmatprep.subr.mxu0 0.0
    %1975 = vmatpush1.msra.mxu0 0.0
    %1976 = vmatprep.subr.mxu0 0.0
    %1977 = vmatpush1.msra.mxu0 0.0
    %1978 = vmatprep.subr.mxu0 0.0
    %1979 = vmatpush1.msra.mxu0 0.0
    %1980 = vmatprep.subr.mxu0 0.0
    %1981 = vmatpush1.msra.mxu0 0.0
    %1982 = vmatprep.subr.mxu0 0.0
    %1983 = vmatpush1.msra.mxu0 0.0
    %1984 = vmatprep.subr.mxu0 0.0
    %1985 = vmatpush1.msra.mxu0 0.0
    %1986 = vmatprep.subr.mxu0 0.0
    %1987 = vmatpush1.msra.mxu0 0.0
    %1988 = vmatprep.subr.mxu0 0.0
    %1989 = vmatpush1.msra.mxu0 0.0
    %1990 = vmatprep.subr.mxu0 0.0
    %1991 = vmatpush1.msra.mxu0 0.0
    %1992 = vmatprep.subr.mxu0 0.0
    %1993 = vmatpush1.msra.mxu0 0.0
    %1994 = vmatprep.subr.mxu0 0.0
    %1995 = vmatpush1.msra.mxu0 0.0
    %1996 = vmatprep.subr.mxu0 0.0
    %1997 = vmatpush1.msra.mxu0 0.0
    %1998 = vmatprep.subr.mxu0 0.0
    %1999 = vmatpush1.msra.mxu0 0.0
    %2000 = vmatprep.subr.mxu0 0.0
    %2001 = vmatpush1.msra.mxu0 0.0
    %2002 = vmatprep.subr.mxu0 0.0
    %2003 = vmatpush1.msra.mxu0 0.0
    %2004 = vmatprep.subr.mxu0 0.0
    %2005 = vmatpush1.msra.mxu0 0.0
    %2006 = vmatprep.subr.mxu0 0.0
    %2007 = vmatpush1.msra.mxu0 0.0
    %2008 = vmatprep.subr.mxu0 0.0
    %2009 = vmatpush1.msra.mxu0 0.0
    %2010 = vmatprep.subr.mxu0 0.0
    %2011 = vmatpush1.msra.mxu0 0.0
    %2012 = vmatprep.subr.mxu0 0.0
    %2013 = vmatpush1.msra.mxu0 0.0
    %2014 = vmatprep.subr.mxu0 0.0
    %2015 = vmatpush1.msra.mxu0 0.0
    %2016 = vmatprep.subr.mxu0 0.0
    %2017 = vmatpush1.msra.mxu0 0.0
    %2018 = vmatprep.subr.mxu0 0.0
    %2019 = vmatpush1.msra.mxu0 0.0
    %2020 = vmatprep.subr.mxu0 0.0
    %2021 = vmatpush1.msra.mxu0 0.0
    %2022 = vmatprep.subr.mxu0 0.0
    %2023 = vmatpush1.msra.mxu0 0.0
    %2024 = vmatprep.mubr.f32.mxu0 0.0
    %2025 = vmatmul.mubr.f32.gmra.mrb[0].mxu0 %v1958
    %v2026 = vpop.f32.mrb[0].mxu0
    %v2027 = vadd.f32 0.0, %v2026
    %v2028 = vpop.f32.mrb[0].mxu0
    %2029 = vdwg.mxu0
    %v2030 = vadd.f32 %v1957, %v2027
    %v2031 = vxor.u32 %v2030, 2147483648
    %v2032 = vmul.f32 %v2031, 1.442695
    %v2033 = vpow.pop %v2032
    %v2034 = vadd.f32 %v2033, 1.0
    %v2035 = vrcp.pop %v2034
    %v2036 = vmul.f32 1.0, %v2035
    %v2037 = vtanh.pop %v2030
    %v2038 = vmul.f32 %v2036, %v1945
    %2040 = vrot.lane.b32.xlu0 %v2037, 32
    %v2041 = vpop.permute.xlu0 %2040
    %v2043 = vmul.f32 %v2036, %v2041
    %2045 = vrot.lane.b32.xlu0 %v2043, 32
    %v2046 = vpop.permute.xlu0 %2045
    %v2048 = vadd.f32 %v2038, %v2046
    %v2049 = vtanh.pop %v2048
    %2051 = vrot.lane.b32.xlu0 %v2049, 32
    %v2052 = vpop.permute.xlu0 %2051
    %v2054 = vmul.f32 %v2036, %v2052
    %2056 = vrot.lane.b32.xlu0 %v2054, 64
    %v2057 = vpop.permute.xlu0 %2056
    %2059 = vst.msk [vmem:[#allocation4 + $0x38] sm:$0xff] %vm232, %v2057
    %2060 = vst.msk [vmem:[%s1227] sm:$0xff] %vm232, %v2057
    %2062 = vrot.lane.b32.xlu0 %v2048, 96
    %v2063 = vpop.permute.xlu0 %2062
    %2065 = vst.msk [vmem:[%s1229] sm:$0xff] %vm232, %v2063
    %v2066 = vld [vmem:[#allocation4] sm:$0xff]
    %v2067 = vld [vmem:[#allocation4 + $0x8] sm:$0xff]
    %v2068 = vld [vmem:[#allocation4 + $0x10] sm:$0xff]
    %v2069 = vld [vmem:[#allocation4 + $0x18] sm:$0xff]
    %v2070 = vld [vmem:[#allocation4 + $0x20] sm:$0xff]
    %v2071 = vld [vmem:[#allocation4 + $0x28] sm:$0xff]
    %v2072 = vld [vmem:[#allocation4 + $0x30] sm:$0xff]
    %v2073 = vld [vmem:[#allocation4 + $0x38] sm:$0xff]
    %v2074 = vld [vmem:[#allocation9] sm:$0xff]
    %v2075 = vld [vmem:[#allocation9 + $0x8] sm:$0xff]
    %v2076 = vld [vmem:[#allocation9 + $0x10] sm:$0xff]
    %v2077 = vld [vmem:[#allocation9 + $0x18] sm:$0xff]
    %v2078 = vld [vmem:[%s8] sm:$0x1]
    %v2080 = vlaneseq
    %v2081 = vshrl.u32 %v2080, 7
    %v2082 = vsub.s32 0, %v2081
    %v2083 = vrot.slane %v2078, %v2082
    %v2086 = vsel %vm232, %v2066, 0
    %v2089 = vsel %vm232, %v2067, 0
    %v2092 = vsel %vm232, %v2068, 0
    %v2095 = vsel %vm232, %v2069, 0
    %v2098 = vsel %vm232, %v2070, 0
    %v2101 = vsel %vm232, %v2071, 0
    %v2104 = vsel %vm232, %v2072, 0
    %v2107 = vsel %vm232, %v2073, 0
    %2109 = vmatprep.subr.mxu0 0.0
    %2110 = vmatpush1.msra.mxu0 %v2074
    %2111 = vmatprep.subr.mxu0 0.0
    %2112 = vmatpush1.msra.mxu0 %v2075
    %2113 = vmatprep.subr.mxu0 0.0
    %2114 = vmatpush1.msra.mxu0 %v2076
    %2115 = vmatprep.subr.mxu0 0.0
    %2116 = vmatpush1.msra.mxu0 %v2077
    %2117 = vmatprep.subr.mxu0 0.0
    %2118 = vmatpush1.msra.mxu0 0.0
    %2119 = vmatprep.subr.mxu0 0.0
    %2120 = vmatpush1.msra.mxu0 0.0
    %2121 = vmatprep.subr.mxu0 0.0
    %2122 = vmatpush1.msra.mxu0 0.0
    %2123 = vmatprep.subr.mxu0 0.0
    %2124 = vmatpush1.msra.mxu0 0.0
    %2125 = vmatprep.subr.mxu0 0.0
    %2126 = vmatpush1.msra.mxu0 0.0
    %2127 = vmatprep.subr.mxu0 0.0
    %2128 = vmatpush1.msra.mxu0 0.0
    %2129 = vmatprep.subr.mxu0 0.0
    %2130 = vmatpush1.msra.mxu0 0.0
    %2131 = vmatprep.subr.mxu0 0.0
    %2132 = vmatpush1.msra.mxu0 0.0
    %2133 = vmatprep.subr.mxu0 0.0
    %2134 = vmatpush1.msra.mxu0 0.0
    %2135 = vmatprep.subr.mxu0 0.0
    %2136 = vmatpush1.msra.mxu0 0.0
    %2137 = vmatprep.subr.mxu0 0.0
    %2138 = vmatpush1.msra.mxu0 0.0
    %2139 = vmatprep.subr.mxu0 0.0
    %2140 = vmatpush1.msra.mxu0 0.0
    %2141 = vmatprep.subr.mxu0 0.0
    %2142 = vmatpush1.msra.mxu0 0.0
    %2143 = vmatprep.subr.mxu0 0.0
    %2144 = vmatpush1.msra.mxu0 0.0
    %2145 = vmatprep.subr.mxu0 0.0
    %2146 = vmatpush1.msra.mxu0 0.0
    %2147 = vmatprep.subr.mxu0 0.0
    %2148 = vmatpush1.msra.mxu0 0.0
    %2149 = vmatprep.subr.mxu0 0.0
    %2150 = vmatpush1.msra.mxu0 0.0
    %2151 = vmatprep.subr.mxu0 0.0
    %2152 = vmatpush1.msra.mxu0 0.0
    %2153 = vmatprep.subr.mxu0 0.0
    %2154 = vmatpush1.msra.mxu0 0.0
    %2155 = vmatprep.subr.mxu0 0.0
    %2156 = vmatpush1.msra.mxu0 0.0
    %2157 = vmatprep.subr.mxu0 0.0
    %2158 = vmatpush1.msra.mxu0 0.0
    %2159 = vmatprep.subr.mxu0 0.0
    %2160 = vmatpush1.msra.mxu0 0.0
    %2161 = vmatprep.subr.mxu0 0.0
    %2162 = vmatpush1.msra.mxu0 0.0
    %2163 = vmatprep.subr.mxu0 0.0
    %2164 = vmatpush1.msra.mxu0 0.0
    %2165 = vmatprep.subr.mxu0 0.0
    %2166 = vmatpush1.msra.mxu0 0.0
    %2167 = vmatprep.subr.mxu0 0.0
    %2168 = vmatpush1.msra.mxu0 0.0
    %2169 = vmatprep.subr.mxu0 0.0
    %2170 = vmatpush1.msra.mxu0 0.0
    %2171 = vmatprep.subr.mxu0 0.0
    %2172 = vmatpush1.msra.mxu0 0.0
    %2173 = vmatprep.mubr.f32.mxu0 0.0
    %2174 = vmatmul.mubr.f32.gmra.mrb[0].mxu0 %v2086
    %v2175 = vpop.f32.mrb[0].mxu0
    %v2176 = vadd.f32 %v2083, %v2175
    %v2177 = vpop.f32.mrb[0].mxu0
    %2178 = vmatprep.mubr.f32.mxu0 0.0
    %2179 = vmatmul.mubr.f32.gmra.mrb[0].mxu0 %v2089
    %v2180 = vpop.f32.mrb[0].mxu0
    %v2181 = vadd.f32 %v2083, %v2180
    %v2182 = vpop.f32.mrb[0].mxu0
    %2183 = vmatprep.mubr.f32.mxu0 0.0
    %2184 = vmatmul.mubr.f32.gmra.mrb[0].mxu0 %v2092
    %v2185 = vpop.f32.mrb[0].mxu0
    %v2186 = vadd.f32 %v2083, %v2185
    %v2187 = vpop.f32.mrb[0].mxu0
    %2188 = vmatprep.mubr.f32.mxu0 0.0
    %2189 = vmatmul.mubr.f32.gmra.mrb[0].mxu0 %v2095
    %v2190 = vpop.f32.mrb[0].mxu0
    %v2191 = vadd.f32 %v2083, %v2190
    %v2192 = vpop.f32.mrb[0].mxu0
    %2193 = vmatprep.mubr.f32.mxu0 0.0
    %2194 = vmatmul.mubr.f32.gmra.mrb[0].mxu0 %v2098
    %v2195 = vpop.f32.mrb[0].mxu0
    %v2196 = vadd.f32 %v2083, %v2195
    %v2197 = vpop.f32.mrb[0].mxu0
    %2198 = vmatprep.mubr.f32.mxu0 0.0
    %2199 = vmatmul.mubr.f32.gmra.mrb[0].mxu0 %v2101
    %v2200 = vpop.f32.mrb[0].mxu0
    %v2201 = vadd.f32 %v2083, %v2200
    %v2202 = vpop.f32.mrb[0].mxu0
    %2203 = vmatprep.mubr.f32.mxu0 0.0
    %2204 = vmatmul.mubr.f32.gmra.mrb[0].mxu0 %v2104
    %v2205 = vpop.f32.mrb[0].mxu0
    %v2206 = vadd.f32 %v2083, %v2205
    %v2207 = vpop.f32.mrb[0].mxu0
    %2208 = vmatprep.mubr.f32.mxu0 0.0
    %2209 = vmatmul.mubr.f32.gmra.mrb[0].mxu0 %v2107
    %v2210 = vpop.f32.mrb[0].mxu0
    %v2211 = vadd.f32 %v2083, %v2210
    %v2212 = vpop.f32.mrb[0].mxu0
    %2213 = vdwg.mxu0
    %2214 = vst [vmem:[#allocation11] sm:$0xff] %v2176
    %2215 = vst [vmem:[#allocation11 + $0x8] sm:$0xff] %v2181
    %2216 = vst [vmem:[#allocation11 + $0x10] sm:$0xff] %v2186
    %2217 = vst [vmem:[#allocation11 + $0x18] sm:$0xff] %v2191
    %2218 = vst [vmem:[#allocation11 + $0x20] sm:$0xff] %v2196
    %2219 = vst [vmem:[#allocation11 + $0x28] sm:$0xff] %v2201
    %2220 = vst [vmem:[#allocation11 + $0x30] sm:$0xff] %v2206
    %2221 = vst [vmem:[#allocation11 + $0x38] sm:$0xff] %v2211
    // Predicated region
    $region50: #{tpu_custom_call.1} parent=1 // pred_check
      _
    $region51: #{tpu_custom_call.1} parent=1 // pred_check_branch
      %2223 = sbr.rel (0) target = $region53
    $region52: #{tpu_custom_call.1} parent=1 // pred_region
      %s2225 = ssub.s32 1024, 1024
      %2226 = vsyncadd [#allocation8], %s2225
      %s2227 = sshll.u32 [#allocation11], 4
      %s2228 = int_to_ptr.vmem [resolvable:$true] %s2227
      %2233 = dma.vmem_to_hbm [thread:$0]  %s2228, 1024, %s9, [#allocation8], 128, 128, 8
    $region53: #{tpu_custom_call.1} parent=1 // pred_fallthru
      _
    // Predicated region
    $region54: #{tpu_custom_call.1} parent=1 // pred_check
      _
    $region55: #{tpu_custom_call.1} parent=1 // pred_check_branch
      %2235 = sbr.rel (0) target = $region57
    $region56: #{tpu_custom_call.1} parent=1 // pred_region
      %2236 = dma.done [#allocation8], 1024
    $region57: #{tpu_custom_call.1} parent=1 // pred_fallthru
      _
    %2237 = vsyncpa [#allocation7], 1
    %2238 = vsyncpa [#allocation10], 1
    %2239 = vsyncpa [#allocation8], 1

</llo_original>
